<compile_context>
chip_gen: v6e
topology: v6e:2x2x1
jax: 0.10.0
libtpu: 0.0.40
codegen_flags: <defaults>
</compile_context>

<pallas_src>
import jax
import jax.numpy as jnp
from jax import lax
from jax.experimental import pallas as pl
from jax.experimental.pallas import tpu as pltpu

# ---- module hyperparameters (from model_condition.py) ----
N_EMBD = 256
N_HEAD = 4
HEAD_SIZE = N_EMBD // N_HEAD      # 64
BLOCK_SIZE = 785                  # max context (T must be <= this)
LN_EPS = 1e-5
TQ = 128                          # query/key tile (lane & sublane friendly)

_BF16 = jnp.bfloat16
_TRANS_B = (((1,), (1,)), ((), ()))     # contract minor dims: a @ b.T on the MXU


def _layernorm(v, gamma, beta):
    # v: (rows, C) f32; gamma/beta: (1, C) f32
    mean = jnp.mean(v, axis=-1, keepdims=True)
    var = jnp.mean((v - mean) ** 2, axis=-1, keepdims=True)
    return (v - mean) * lax.rsqrt(var + LN_EPS) * gamma + beta


# ---------------- stage 1: LN1 + fused QKV projection ----------------
def _qkv_kernel(x_ref, g1_ref, b1_ref, wqkv_ref, qkv_ref):
    h1 = _layernorm(x_ref[0], g1_ref[...], b1_ref[...])            # (TQ, C) f32
    qkv_ref[0] = jnp.dot(h1.astype(_BF16), wqkv_ref[...],
                         preferred_element_type=jnp.float32).astype(_BF16)


# ---------------- stage 2: flash attention + proj + LN2 + FFN ----------------
def _online_update(m, l, acc, s, v_h):
    # s: (TQ, TQ) f32 scores; v_h: (TQ, hs) bf16
    m_new = jnp.maximum(m, jnp.max(s, axis=-1, keepdims=True))
    alpha = jnp.exp(m - m_new)
    p = jnp.exp(s - m_new)
    l_new = alpha * l + jnp.sum(p, axis=-1, keepdims=True)
    acc_new = alpha * acc + jnp.dot(p.astype(_BF16), v_h,
                                    preferred_element_type=jnp.float32)
    return m_new, l_new, acc_new


def _attn_ffn_kernel(x_ref, qkv_ref,
                     wp_ref, bp_ref,
                     g2_ref, b2_ref,
                     w1_ref, bf1_ref,
                     w2_ref, bf2_ref,
                     o_ref):
    qi = pl.program_id(1)
    r0 = pl.multiple_of(qi * TQ, TQ)

    # Triangular mask for the diagonal kv block only (hoisted out of all loops).
    row = lax.broadcasted_iota(jnp.int32, (TQ, TQ), 0)
    col = lax.broadcasted_iota(jnp.int32, (TQ, TQ), 1)
    tri = col <= row

    # Query tile (scale folded into the Q weight columns) and diagonal K/V block,
    # loaded once per grid step with 128-aligned lane offsets; heads are sliced
    # from the in-register values.
    q_all = qkv_ref[0, pl.ds(r0, TQ), 0:N_EMBD]                     # (TQ, C) bf16
    kd_all = qkv_ref[0, pl.ds(r0, TQ), N_EMBD:2 * N_EMBD]
    vd_all = qkv_ref[0, pl.ds(r0, TQ), 2 * N_EMBD:3 * N_EMBD]

    head_outs = []
    for h in range(N_HEAD):
        c0 = h * HEAD_SIZE
        q_h = q_all[:, c0:c0 + HEAD_SIZE]                           # (TQ, hs) bf16

        def body(j, carry, q_h=q_h, c0=c0):
            m, l, acc = carry
            k0 = pl.multiple_of(j * TQ, TQ)
            k_blk = qkv_ref[0, pl.ds(k0, TQ), N_EMBD:2 * N_EMBD]    # (TQ, C) bf16
            v_blk = qkv_ref[0, pl.ds(k0, TQ), 2 * N_EMBD:3 * N_EMBD]
            s = lax.dot_general(q_h, k_blk[:, c0:c0 + HEAD_SIZE], _TRANS_B,
                                preferred_element_type=jnp.float32)  # (TQ, TQ)
            return _online_update(m, l, acc, s, v_blk[:, c0:c0 + HEAD_SIZE])

        carry0 = (jnp.full((TQ, 1), -jnp.inf, jnp.float32),
                  jnp.zeros((TQ, 1), jnp.float32),
                  jnp.zeros((TQ, HEAD_SIZE), jnp.float32))
        # Key/value blocks strictly below the diagonal: no mask work at all.
        m, l, acc = lax.fori_loop(0, qi, body, carry0)

        # Diagonal block: the only place the causal mask is applied.
        s = lax.dot_general(q_h, kd_all[:, c0:c0 + HEAD_SIZE], _TRANS_B,
                            preferred_element_type=jnp.float32)
        s = jnp.where(tri, s, -jnp.inf)
        m, l, acc = _online_update(m, l, acc, s, vd_all[:, c0:c0 + HEAD_SIZE])

        head_outs.append(acc * pl.reciprocal(l, approx=True))       # (TQ, hs) f32

    # Single full-depth (K = C = 256) output-projection matmul.
    sa = jnp.concatenate(head_outs, axis=-1).astype(_BF16)          # (TQ, C) bf16
    proj = jnp.dot(sa, wp_ref[...], preferred_element_type=jnp.float32) + bp_ref[...]

    x1 = x_ref[0] + proj                                            # (TQ, C) f32

    # ---------------- LN2 + FFN ----------------
    h2 = _layernorm(x1, g2_ref[...], b2_ref[...]).astype(_BF16)
    ff = jnp.dot(h2, w1_ref[...], preferred_element_type=jnp.float32) + bf1_ref[...]
    ff = jnp.maximum(ff, 0.0).astype(_BF16)
    ff = jnp.dot(ff, w2_ref[...], preferred_element_type=jnp.float32) + bf2_ref[...]

    o_ref[0] = x1 + ff                                              # lane-dense (TQ, 256)


def block_forward(x, params):
    """x: (B, T, C) float32. params: dict of weights (laid out for x @ W)."""
    B, T, C = x.shape
    assert C == N_EMBD and T <= BLOCK_SIZE

    # pad sequence to a multiple of TQ (lane/sublane dense tiles, e.g. 785 -> 896)
    t_pad = ((T + TQ - 1) // TQ) * TQ
    if t_pad != T:
        x = jnp.pad(x, ((0, 0), (0, t_pad - T), (0, 0)))
    n_qt = t_pad // TQ

    # Fuse per-head Q/K/V weights into one (C, 3C) bf16 matrix, head-major columns,
    # with the softmax scale C**-0.5 folded into the Q columns (weights only).
    scale = float(N_EMBD) ** -0.5
    wq = jnp.transpose(params["wq"], (1, 0, 2)).reshape(C, C) * scale
    wk = jnp.transpose(params["wk"], (1, 0, 2)).reshape(C, C)
    wv = jnp.transpose(params["wv"], (1, 0, 2)).reshape(C, C)
    wqkv = jnp.concatenate([wq, wk, wv], axis=1).astype(_BF16)      # (C, 3C)

    def const_spec(a):
        nd = a.ndim
        return pl.BlockSpec(a.shape, lambda b, q, _nd=nd: (0,) * _nd)

    # ---- stage 1: LN1 + fused QKV (per 128-row tile, both grid axes parallel) ----
    qkv = pl.pallas_call(
        _qkv_kernel,
        out_shape=jax.ShapeDtypeStruct((B, t_pad, 3 * C), _BF16),
        grid=(B, n_qt),
        in_specs=[pl.BlockSpec((1, TQ, C), lambda b, q: (b, q, 0)),
                  const_spec(params["ln1_g"]), const_spec(params["ln1_b"]),
                  const_spec(wqkv)],
        out_specs=pl.BlockSpec((1, TQ, 3 * C), lambda b, q: (b, q, 0)),
        compiler_params=pltpu.CompilerParams(
            dimension_semantics=("parallel", "parallel")),
    )(x, params["ln1_g"], params["ln1_b"], wqkv)

    # ---- stage 2: attention + proj + residual + LN2 + FFN + residual ----
    weight_args = (
        params["wproj"].astype(_BF16), params["bproj"],
        params["ln2_g"], params["ln2_b"],
        params["w1"].astype(_BF16), params["b1"],
        params["w2"].astype(_BF16), params["b2"],
    )
    in_specs = [pl.BlockSpec((1, TQ, C), lambda b, q: (b, q, 0)),        # x tile
                pl.BlockSpec((1, t_pad, 3 * C), lambda b, q: (b, 0, 0))]  # per-batch QKV
    in_specs += [const_spec(a) for a in weight_args]

    out = pl.pallas_call(
        _attn_ffn_kernel,
        out_shape=jax.ShapeDtypeStruct((B, t_pad, C), jnp.float32),
        grid=(B, n_qt),
        in_specs=in_specs,
        out_specs=pl.BlockSpec((1, TQ, C), lambda b, q: (b, q, 0)),
        compiler_params=pltpu.CompilerParams(
            dimension_semantics=("parallel", "parallel")),
    )(x, qkv, *weight_args)
    return out[:, :T, :]


# ---------------- pure-JAX f32 reference (mirrors the PyTorch forward) ----------------
def block_reference(x, params):
    def ln(v, g, b):
        mean = jnp.mean(v, axis=-1, keepdims=True)
        var = jnp.mean((v - mean) ** 2, axis=-1, keepdims=True)
        return (v - mean) / jnp.sqrt(var + LN_EPS) * g + b

    B, T, C = x.shape
    h1 = ln(x, params["ln1_g"], params["ln1_b"])
    mask = jnp.tril(jnp.ones((T, T), bool))
    outs = []
    for h in range(N_HEAD):
        q = h1 @ params["wq"][h]
        k = h1 @ params["wk"][h]
        v = h1 @ params["wv"][h]
        wei = jnp.einsum("btd,bsd->bts", q, k) * (C ** -0.5)
        wei = jnp.where(mask[None], wei, -jnp.inf)
        wei = jax.nn.softmax(wei, axis=-1)
        outs.append(jnp.einsum("bts,bsd->btd", wei, v))
    sa = jnp.concatenate(outs, axis=-1) @ params["wproj"] + params["bproj"]
    x1 = x + sa
    h2 = ln(x1, params["ln2_g"], params["ln2_b"])
    ff = jnp.maximum(h2 @ params["w1"] + params["b1"], 0.0) @ params["w2"] + params["b2"]
    return x1 + ff


def make_params(key):
    ks = jax.random.split(key, 12)
    s = 0.02
    # PyTorch Linear weight is (out, in); store transposed (in, out) so kernel does x @ W.
    params = {
        "ln1_g": (1.0 + s * jax.random.normal(ks[0], (1, N_EMBD))).astype(jnp.float32),
        "ln1_b": (s * jax.random.normal(ks[1], (1, N_EMBD))).astype(jnp.float32),
        "wq": (s * jax.random.normal(ks[2], (N_HEAD, N_EMBD, HEAD_SIZE))).astype(jnp.float32),
        "wk": (s * jax.random.normal(ks[3], (N_HEAD, N_EMBD, HEAD_SIZE))).astype(jnp.float32),
        "wv": (s * jax.random.normal(ks[4], (N_HEAD, N_EMBD, HEAD_SIZE))).astype(jnp.float32),
        "wproj": (s * jax.random.normal(ks[5], (N_EMBD, N_EMBD))).astype(jnp.float32),
        "bproj": (s * jax.random.normal(ks[6], (1, N_EMBD))).astype(jnp.float32),
        "ln2_g": (1.0 + s * jax.random.normal(ks[7], (1, N_EMBD))).astype(jnp.float32),
        "ln2_b": (s * jax.random.normal(ks[8], (1, N_EMBD))).astype(jnp.float32),
        "w1": (s * jax.random.normal(ks[9], (N_EMBD, 4 * N_EMBD))).astype(jnp.float32),
        "b1": (s * jax.random.normal(ks[10], (1, 4 * N_EMBD))).astype(jnp.float32),
        "w2": (s * jax.random.normal(ks[11], (4 * N_EMBD, N_EMBD))).astype(jnp.float32),
        "b2": jnp.zeros((1, N_EMBD), jnp.float32),
    }
    return params


if __name__ == "__main__":
    key = jax.random.PRNGKey(0)
    kp, kx = jax.random.split(key)
    params = make_params(kp)

    # Small shapes; T <= block_size (785), C = n_embd = 256.
    # T = 200 -> t_pad = 256, n_qt = 2: exercises both the below-diagonal
    # fori_loop path and a partially padded tile.
    B, T = 2, 200
    x = jax.random.normal(kx, (B, T, N_EMBD), dtype=jnp.float32)

    out = block_forward(x, params)
    out = jax.block_until_ready(out)

    ref = block_reference(x, params)
    assert out.shape == (B, T, N_EMBD)
    max_err = float(jnp.max(jnp.abs(out - ref)))
    # bf16 matmul inputs + approx reciprocal -> tolerance loosened vs pure-f32 reference
    assert jnp.allclose(out, ref, atol=2e-2, rtol=2e-2), max_err

    print("KERNEL_OK")
</pallas_src>

<mosaic_0001>
module attributes {stable_mosaic.version = 11 : i64} {
  func.func @_qkv_kernel(%arg0: i32, %arg1: i32, %arg2: memref<1x128x256xf32, #tpu.memory_space<vmem>>, %arg3: memref<1x256xf32, #tpu.memory_space<vmem>>, %arg4: memref<1x256xf32, #tpu.memory_space<vmem>>, %arg5: memref<256x768xbf16, #tpu.memory_space<vmem>>, %arg6: memref<1x128x768xbf16, #tpu.memory_space<vmem>>) attributes {dimension_semantics = [#tpu.dimension_semantics<parallel>, #tpu.dimension_semantics<parallel>], iteration_bounds = array<i64: 2, 2>, scalar_prefetch = 0 : i64, scratch_operands = 0 : i64, tpu.core_type = #tpu.core_type<tc>, window_params = [{transform_indices = @transform_0, window_bounds = array<i64: 1, 128, 256>}, {pipeline_mode = #tpu.pipeline_mode<synchronous>, transform_indices = @transform_1, window_bounds = array<i64: 1, 256>}, {pipeline_mode = #tpu.pipeline_mode<synchronous>, transform_indices = @transform_2, window_bounds = array<i64: 1, 256>}, {pipeline_mode = #tpu.pipeline_mode<synchronous>, transform_indices = @transform_3, window_bounds = array<i64: 256, 768>}, {transform_indices = @transform_4, window_bounds = array<i64: 1, 128, 768>}]} {
    %c0 = arith.constant 0 : index
    %c0_0 = arith.constant 0 : index
    %c0_1 = arith.constant 0 : index
    %0 = vector.load %arg2[%c0, %c0_0, %c0_1] : memref<1x128x256xf32, #tpu.memory_space<vmem>>, vector<1x128x256xf32>
    %1 = vector.shape_cast %0 : vector<1x128x256xf32> to vector<128x256xf32>
    %c0_2 = arith.constant 0 : index
    %c0_3 = arith.constant 0 : index
    %2 = vector.load %arg3[%c0_2, %c0_3] : memref<1x256xf32, #tpu.memory_space<vmem>>, vector<1x256xf32>
    %c0_4 = arith.constant 0 : index
    %c0_5 = arith.constant 0 : index
    %3 = vector.load %arg4[%c0_4, %c0_5] : memref<1x256xf32, #tpu.memory_space<vmem>>, vector<1x256xf32>
    %cst = arith.constant dense<0.000000e+00> : vector<128xf32>
    %4 = vector.multi_reduction <add>, %1, %cst [1] : vector<128x256xf32> to vector<128xf32>
    %5 = vector.shape_cast %4 : vector<128xf32> to vector<128x1xf32>
    %cst_6 = arith.constant 2.560000e+02 : f32
    %6 = vector.broadcast %cst_6 : f32 to vector<128x1xf32>
    %7 = arith.divf %5, %6 : vector<128x1xf32>
    %8 = vector.broadcast %7 : vector<128x1xf32> to vector<128x256xf32>
    %9 = arith.subf %1, %8 : vector<128x256xf32>
    %10 = arith.mulf %9, %9 : vector<128x256xf32>
    %cst_7 = arith.constant dense<0.000000e+00> : vector<128xf32>
    %11 = vector.multi_reduction <add>, %10, %cst_7 [1] : vector<128x256xf32> to vector<128xf32>
    %12 = vector.shape_cast %11 : vector<128xf32> to vector<128x1xf32>
    %cst_8 = arith.constant 2.560000e+02 : f32
    %13 = vector.broadcast %cst_8 : f32 to vector<128x1xf32>
    %14 = arith.divf %12, %13 : vector<128x1xf32>
    %15 = vector.broadcast %7 : vector<128x1xf32> to vector<128x256xf32>
    %16 = arith.subf %1, %15 : vector<128x256xf32>
    %cst_9 = arith.constant 9.99999974E-6 : f32
    %17 = vector.broadcast %cst_9 : f32 to vector<128x1xf32>
    %18 = arith.addf %14, %17 : vector<128x1xf32>
    %19 = math.rsqrt %18 : vector<128x1xf32>
    %20 = vector.broadcast %19 : vector<128x1xf32> to vector<128x256xf32>
    %21 = arith.mulf %16, %20 : vector<128x256xf32>
    %22 = vector.broadcast %2 : vector<1x256xf32> to vector<128x256xf32>
    %23 = arith.mulf %21, %22 : vector<128x256xf32>
    %24 = vector.broadcast %3 : vector<1x256xf32> to vector<128x256xf32>
    %25 = arith.addf %23, %24 : vector<128x256xf32>
    %26 = arith.truncf %25 : vector<128x256xf32> to vector<128x256xbf16>
    %c0_10 = arith.constant 0 : index
    %c0_11 = arith.constant 0 : index
    %27 = vector.load %arg5[%c0_10, %c0_11] : memref<256x768xbf16, #tpu.memory_space<vmem>>, vector<256x768xbf16>
    %cst_12 = arith.constant dense<0.000000e+00> : vector<128x768xf32>
    %28 = tpu.matmul %26, %27, %cst_12 {dimension_numbers = #tpu.dot_dimension_numbers<[1], [0], [0], [1], [0, 0, 1, 1], [], []>} : vector<128x256xbf16>, vector<256x768xbf16>, vector<128x768xf32> -> vector<128x768xf32>
    %29 = arith.truncf %28 : vector<128x768xf32> to vector<128x768xbf16>
    %c0_13 = arith.constant 0 : index
    %c0_14 = arith.constant 0 : index
    %c0_15 = arith.constant 0 : index
    %30 = vector.load %arg6[%c0_13, %c0_14, %c0_15] : memref<1x128x768xbf16, #tpu.memory_space<vmem>>, vector<1x128x768xbf16>
    %31 = vector.shape_cast %30 : vector<1x128x768xbf16> to vector<128x768xbf16>
    %32 = vector.shape_cast %29 : vector<128x768xbf16> to vector<1x128x768xbf16>
    tpu.vector_store %arg6[%c0_13, %c0_14, %c0_15], %32 {strides = array<i32>} : memref<1x128x768xbf16, #tpu.memory_space<vmem>>, vector<1x128x768xbf16>,
    return
  }
  func.func @transform_0(%arg0: i32, %arg1: i32) -> (i32, i32, i32) {
    %c0_i32 = arith.constant 0 : i32
    %c0_i32_0 = arith.constant 0 : i32
    return %arg0, %arg1, %c0_i32 : i32, i32, i32
  }
  func.func @transform_1(%arg0: i32, %arg1: i32) -> (i32, i32) {
    %c0_i32 = arith.constant 0 : i32
    %c0_i32_0 = arith.constant 0 : i32
    %c0_i32_1 = arith.constant 0 : i32
    return %c0_i32, %c0_i32_0 : i32, i32
  }
  func.func @transform_2(%arg0: i32, %arg1: i32) -> (i32, i32) {
    %c0_i32 = arith.constant 0 : i32
    %c0_i32_0 = arith.constant 0 : i32
    %c0_i32_1 = arith.constant 0 : i32
    return %c0_i32, %c0_i32_0 : i32, i32
  }
  func.func @transform_3(%arg0: i32, %arg1: i32) -> (i32, i32) {
    %c0_i32 = arith.constant 0 : i32
    %c0_i32_0 = arith.constant 0 : i32
    %c0_i32_1 = arith.constant 0 : i32
    return %c0_i32, %c0_i32_0 : i32, i32
  }
  func.func @transform_4(%arg0: i32, %arg1: i32) -> (i32, i32, i32) {
    %c0_i32 = arith.constant 0 : i32
    %c0_i32_0 = arith.constant 0 : i32
    return %arg0, %arg1, %c0_i32 : i32, i32, i32
  }
}

</mosaic_0001>

<llo_original>
// kernel: tpu_custom_call.1
$region0: #{tpu_custom_call.1}
  #allocation0 [shape = 'u32[]', space=smem, size = 0x4, offset = 0x4, fixed_abs, tag = 'smem constant byte address 0x4 - core index']
  #allocation1 [shape = 'u32[144,128]{1,0:T(1,128)}', space=vmem, size = 0x12000, scoped, tag = 'internal scratch']
  %s0 = inlined_call_operand.hbm [shape: f32[2,256,256], index: 0, kind: input, shape index: {}]
  %s1 = inlined_call_operand.hbm [shape: f32[1,256], index: 1, kind: input, shape index: {}]
  %s2 = inlined_call_operand.vmem [shape: f32[1,256], index: 2, kind: input, shape index: {}]
  %s3 = inlined_call_operand.hbm [shape: bf16[256,768], index: 3, kind: input, shape index: {}]
  %s4 = inlined_call_operand.hbm [shape: bf16[2,256,768], index: 4, kind: output, shape index: {}]
  %s5 = sld [smem:[#allocation0]]
  $region61: #{tpu_custom_call.1} parent=0
    _
  %s7 = ssub.s32 1, %s5
  %s8 = scalar_select 0, %s7, %s5
  $region1: #{tpu_custom_call.1} parent=0
    #allocation2 [shape = 'u8[262144]{0}', space=vmem, size = 0x40000, scoped, tag = 'input window, operand 0']
    #allocation3 [shape = 's32[2]{0}', space=sflag, size = 0x8, scoped, tag = 'scoped memory for tpu_custom_call.1']
    #allocation4 [shape = 's32[2]{0}', space=sflag, size = 0x8, scoped, tag = 'scoped memory for tpu_custom_call.1']
    #allocation5 [shape = 'u8[1024]{0}', space=vmem, size = 0x400, scoped, tag = 'input window, operand 1, single buffered']
    #allocation6 [shape = 's32[1]{0}', space=sflag, size = 0x4, scoped, tag = 'scoped memory for tpu_custom_call.1']
    #allocation7 [shape = 'u8[393216]{0}', space=vmem, size = 0x60000, scoped, tag = 'input window, operand 3, single buffered']
    #allocation8 [shape = 'u8[393216]{0}', space=vmem, size = 0x60000, scoped, tag = 'output window, operand 0']
    %9 = vsyncpa [#allocation3], 0
    %s10 = scalar_lea.sflag [#allocation3], 1
    %11 = vsyncpa %s10, 0
    %12 = vsyncpa [#allocation6], 0
    %13 = vsyncpa [#allocation4], 0
    %s14 = scalar_lea.sflag [#allocation4], 1
    %15 = vsyncpa %s14, 0
    loop: start=0, step=1, limit=6
    $region2: #{tpu_custom_call.1} parent=1 // loop_pre_header
      _
    $region3: #{tpu_custom_call.1} parent=1 // loop_header
      %s17 = sphi 0, %s21
      %p18 = scmp.ge.s32.totalorder %s17, 6
      %s24 = sphi 0, %s36
      %s25 = sphi 0, %s32
      %s26 = sphi 0, %s24
      %s27 = sphi 0, %s25
      %s28 = sphi 0, %s26
      %s29 = sphi 0, %s27
      %s41 = sphi 0, %s43
      %s44 = sphi 0, %s41
      %s45 = sphi 0, %s44
      %s61 = sphi 0, %s45
      %s65 = sphi 0, %s65
      %s67 = sphi 0, %s65
      %s68 = sphi 0, %s67
      %s82 = sphi 0, %s68
      %s86 = sphi 0, %s86
      %s88 = sphi 0, %s86
      %s89 = sphi 0, %s88
      %s103 = sphi 0, %s89
      %s107 = sphi 0, %s107
      %s109 = sphi 0, %s107
      %s110 = sphi 0, %s109
      %s124 = sphi 0, %s110
      %s132 = sphi 0, %s134
      %s135 = sphi 0, %s132
      %s136 = sphi 0, %s135
      %s152 = sphi 0, %s136
    $region4: #{tpu_custom_call.1} parent=1 // loop_header_branch
      %20 = sbr.rel (%p18) target = $region8
    $region5: #{tpu_custom_call.1} parent=1 // loop_body
      %s22 = ssub.s32 %s17, 1
      %s23 = ssub.s32 %s17, 2
      %s30 = sadd.s32 1, %s25
      %p31 = scmp.ge.s32.totalorder %s30, 2
      %s32 = scalar_select %p31, 0, %s30
      %s33 = sadd.s32 1, %s24
      %s34 = scalar_select %p31, %s33, %s24
      %p35 = scmp.ge.s32.totalorder %s34, 2
      %s36 = scalar_select %p35, 0, %s34
      %s37 = ssub.s32 %s24, %s36
      %s38 = ssub.s32 %s25, %s32
      %s39 = sor.u32 %s37, %s38
      %p40 = scmp.eq.s32.totalorder %s39, 0
      %s42 = sadd.s32 %s41, 1
      %s43 = scalar_select %p40, %s41, %s42
      %p46 = pneg %p40
      %p47 = scmp.eq.s32.totalorder %s17, 3
      %p48 = por %p46, %p47
      %p49 = scmp.ne.s32.totalorder %s41, %s44
      %p50 = scmp.eq.s32.totalorder %s17, 0
      %p51 = por %p49, %p50
      %p52 = scmp.ne.s32.totalorder %s41, %s44
      %p53 = scmp.eq.s32.totalorder %s22, 3
      %p54 = por %p52, %p53
      %p55 = scmp.ne.s32.totalorder %s44, %s45
      %p56 = scmp.eq.s32.totalorder %s22, 0
      %p57 = por %p55, %p56
      %p58 = scmp.ne.s32.totalorder %s44, %s45
      %p59 = scmp.eq.s32.totalorder %s23, 3
      %p60 = por %p58, %p59
      %p62 = scmp.ne.s32.totalorder %s45, %s61
      %p63 = scmp.eq.s32.totalorder %s23, 0
      %p64 = por %p62, %p63
      %s66 = sadd.s32 %s65, 1
      %p69 = scmp.eq.s32.totalorder %s17, 3
      %p70 = scmp.ne.s32.totalorder %s65, %s67
      %p71 = scmp.eq.s32.totalorder %s17, 0
      %p72 = por %p70, %p71
      %p73 = scmp.ne.s32.totalorder %s65, %s67
      %p74 = scmp.eq.s32.totalorder %s22, 3
      %p75 = por %p73, %p74
      %p76 = scmp.ne.s32.totalorder %s67, %s68
      %p77 = scmp.eq.s32.totalorder %s22, 0
      %p78 = por %p76, %p77
      %p79 = scmp.ne.s32.totalorder %s67, %s68
      %p80 = scmp.eq.s32.totalorder %s23, 3
      %p81 = por %p79, %p80
      %p83 = scmp.ne.s32.totalorder %s68, %s82
      %p84 = scmp.eq.s32.totalorder %s23, 0
      %p85 = por %p83, %p84
      %s87 = sadd.s32 %s86, 1
      %p90 = scmp.eq.s32.totalorder %s17, 3
      %p91 = scmp.ne.s32.totalorder %s86, %s88
      %p92 = scmp.eq.s32.totalorder %s17, 0
      %p93 = por %p91, %p92
      %p94 = scmp.ne.s32.totalorder %s86, %s88
      %p95 = scmp.eq.s32.totalorder %s22, 3
      %p96 = por %p94, %p95
      %p97 = scmp.ne.s32.totalorder %s88, %s89
      %p98 = scmp.eq.s32.totalorder %s22, 0
      %p99 = por %p97, %p98
      %p100 = scmp.ne.s32.totalorder %s88, %s89
      %p101 = scmp.eq.s32.totalorder %s23, 3
      %p102 = por %p100, %p101
      %p104 = scmp.ne.s32.totalorder %s89, %s103
      %p105 = scmp.eq.s32.totalorder %s23, 0
      %p106 = por %p104, %p105
      %s108 = sadd.s32 %s107, 1
      %p111 = scmp.eq.s32.totalorder %s17, 3
      %p112 = scmp.ne.s32.totalorder %s107, %s109
      %p113 = scmp.eq.s32.totalorder %s17, 0
      %p114 = por %p112, %p113
      %p115 = scmp.ne.s32.totalorder %s107, %s109
      %p116 = scmp.eq.s32.totalorder %s22, 3
      %p117 = por %p115, %p116
      %p118 = scmp.ne.s32.totalorder %s109, %s110
      %p119 = scmp.eq.s32.totalorder %s22, 0
      %p120 = por %p118, %p119
      %p121 = scmp.ne.s32.totalorder %s109, %s110
      %p122 = scmp.eq.s32.totalorder %s23, 3
      %p123 = por %p121, %p122
      %p125 = scmp.ne.s32.totalorder %s110, %s124
      %p126 = scmp.eq.s32.totalorder %s23, 0
      %p127 = por %p125, %p126
      %s128 = ssub.s32 %s24, %s36
      %s129 = ssub.s32 %s25, %s32
      %s130 = sor.u32 %s128, %s129
      %p131 = scmp.eq.s32.totalorder %s130, 0
      %s133 = sadd.s32 %s132, 1
      %s134 = scalar_select %p131, %s132, %s133
      %p137 = pneg %p131
      %p138 = scmp.eq.s32.totalorder %s17, 3
      %p139 = por %p137, %p138
      %p140 = scmp.ne.s32.totalorder %s132, %s135
      %p141 = scmp.eq.s32.totalorder %s17, 0
      %p142 = por %p140, %p141
      %p143 = scmp.ne.s32.totalorder %s132, %s135
      %p144 = scmp.eq.s32.totalorder %s22, 3
      %p145 = por %p143, %p144
      %p146 = scmp.ne.s32.totalorder %s135, %s136
      %p147 = scmp.eq.s32.totalorder %s22, 0
      %p148 = por %p146, %p147
      %p149 = scmp.ne.s32.totalorder %s135, %s136
      %p150 = scmp.eq.s32.totalorder %s23, 3
      %p151 = por %p149, %p150
      %p153 = scmp.ne.s32.totalorder %s136, %s152
      %p154 = scmp.eq.s32.totalorder %s23, 0
      %p155 = por %p153, %p154
      %p156 = scmp.le.s32.totalorder 1, %s17
      %p157 = scmp.lt.s32.totalorder %s17, 5
      %p158 = pnand %p156, %p157
      %p159 = pneg %p158
      // Predicated region
      $region9: #{tpu_custom_call.1} parent=5 // pred_check
        _
      $region10: #{tpu_custom_call.1} parent=5 // pred_check_branch
        %161 = sbr.rel (%p158) target = $region12
      $region11: #{tpu_custom_call.1} parent=5 // pred_region
        %s162 = ssub.s32 %s17, 1
        // Predicated region
        $region13: #{tpu_custom_call.1} parent=11 // pred_check
          %p163 = pneg %p78
        $region14: #{tpu_custom_call.1} parent=11 // pred_check_branch
          %165 = sbr.rel (%p163) target = $region16
        $region15: #{tpu_custom_call.1} parent=11 // pred_region
          %s167 = ssub.s32 32, 32
          %168 = vsyncadd [#allocation6], %s167
          %s170 = sshll.u32 [#allocation5], 4
          %s171 = int_to_ptr.vmem [resolvable:$true] %s170
          %173 = dma.hbm_to_vmem [thread:$0]  %s1, 32, %s171, [#allocation6]
        $region16: #{tpu_custom_call.1} parent=11 // pred_fallthru
          _
        // Predicated region
        $region17: #{tpu_custom_call.1} parent=11 // pred_check
          %p174 = pneg %p99
        $region18: #{tpu_custom_call.1} parent=11 // pred_check_branch
          %176 = sbr.rel (%p174) target = $region20
        $region19: #{tpu_custom_call.1} parent=11 // pred_region
          _
        $region20: #{tpu_custom_call.1} parent=11 // pred_fallthru
          _
        // Predicated region
        $region21: #{tpu_custom_call.1} parent=11 // pred_check
          %p177 = pneg %p120
        $region22: #{tpu_custom_call.1} parent=11 // pred_check_branch
          %179 = sbr.rel (%p177) target = $region24
        $region23: #{tpu_custom_call.1} parent=11 // pred_region
          %s181 = ssub.s32 12288, 12288
          %182 = vsyncadd [#allocation6], %s181
          %s183 = sshll.u32 [#allocation7], 4
          %s184 = int_to_ptr.vmem [resolvable:$true] %s183
          %189 = dma.hbm_to_vmem [thread:$0]  %s3, 12288, %s184, [#allocation6], 384, 384, 24
        $region24: #{tpu_custom_call.1} parent=11 // pred_fallthru
          _
      $region12: #{tpu_custom_call.1} parent=5 // pred_fallthru
        _
      %p190 = scmp.lt.s32.totalorder %s17, 4
      // Predicated region
      $region25: #{tpu_custom_call.1} parent=5 // pred_check
        %p191 = pneg %p190
      $region26: #{tpu_custom_call.1} parent=5 // pred_check_branch
        %193 = sbr.rel (%p191) target = $region28
      $region27: #{tpu_custom_call.1} parent=5 // pred_region
        // Predicated region
        $region29: #{tpu_custom_call.1} parent=27 // pred_check
          %p194 = pneg %p51
        $region30: #{tpu_custom_call.1} parent=27 // pred_check_branch
          %196 = sbr.rel (%p194) target = $region32
        $region31: #{tpu_custom_call.1} parent=27 // pred_region
          %s197 = sand.u32 %s41, 1
          %s198 = scalar_lea.sflag [#allocation3], %s197
          %s199 = sand.u32 %s41, 1
          %s200 = smul.addr %s199, 256
          %s201 = scalar_lea.vmem [#allocation2], %s200
          %s202 = smul.u32 16, %s25
          %s204 = ssub.s32 4096, 4096
          %205 = vsyncadd %s198, %s204
          %s206 = smul.addr %s202, 2
          %s207 = smul.addr %s24, 64
          %s208 = sadd.s32 %s206, %s207
          %s209 = smul.addr %s208, 128
          %s210 = scalar_lea.hbm %s0, %s209
          %s211 = sshll.u32 %s201, 4
          %s212 = int_to_ptr.vmem [resolvable:$true] %s211
          %217 = dma.hbm_to_vmem [thread:$0]  %s210, 4096, %s212, %s198, 256, 256, 16
        $region32: #{tpu_custom_call.1} parent=27 // pred_fallthru
          _
      $region28: #{tpu_custom_call.1} parent=5 // pred_fallthru
        _
      %p218 = scmp.le.s32.totalorder 1, %s17
      %p219 = scmp.lt.s32.totalorder %s17, 5
      %p220 = pnand %p218, %p219
      %p221 = pneg %p220
      // Predicated region
      $region33: #{tpu_custom_call.1} parent=5 // pred_check
        _
      $region34: #{tpu_custom_call.1} parent=5 // pred_check_branch
        %223 = sbr.rel (%p220) target = $region36
      $region35: #{tpu_custom_call.1} parent=5 // pred_region
        %s224 = ssub.s32 %s17, 1
        %s225 = sand.u32 %s44, 1
        %s226 = scalar_lea.sflag [#allocation3], %s225
        %s227 = sand.u32 %s44, 1
        %s228 = smul.addr %s227, 256
        %s229 = scalar_lea.vmem [#allocation2], %s228
        // Predicated region
        $region37: #{tpu_custom_call.1} parent=35 // pred_check
          %p230 = pneg %p57
        $region38: #{tpu_custom_call.1} parent=35 // pred_check_branch
          %232 = sbr.rel (%p230) target = $region40
        $region39: #{tpu_custom_call.1} parent=35 // pred_region
          %233 = dma.done %s226, 4096
        $region40: #{tpu_custom_call.1} parent=35 // pred_fallthru
          _
        // Predicated region
        $region41: #{tpu_custom_call.1} parent=35 // pred_check
          %p234 = pneg %p78
        $region42: #{tpu_custom_call.1} parent=35 // pred_check_branch
          %236 = sbr.rel (%p234) target = $region44
        $region43: #{tpu_custom_call.1} parent=35 // pred_region
          %237 = dma.done [#allocation6], 32
        $region44: #{tpu_custom_call.1} parent=35 // pred_fallthru
          _
        // Predicated region
        $region45: #{tpu_custom_call.1} parent=35 // pred_check
          %p238 = pneg %p120
        $region46: #{tpu_custom_call.1} parent=35 // pred_check_branch
          %240 = sbr.rel (%p238) target = $region48
        $region47: #{tpu_custom_call.1} parent=35 // pred_region
          %241 = dma.done [#allocation6], 12288
        $region48: #{tpu_custom_call.1} parent=35 // pred_fallthru
          _
        %s242 = sand.u32 %s44, 1
        %s243 = scalar_lea.sflag [#allocation3], %s242
        %s244 = sand.u32 %s44, 1
        %s245 = smul.addr %s244, 256
        %s246 = scalar_lea.vmem [#allocation2], %s245
        %p247 = pneg %p57
        %p248 = pneg %p54
        %p249 = pneg %p78
        %p250 = pneg %p75
        %p251 = pneg %p99
        %p252 = pneg %p96
        %p253 = pneg %p120
        %p254 = pneg %p117
        %p255 = pneg %p148
        %p256 = pneg %p145
        %s257 = sand.u32 %s135, 1
        %s258 = scalar_lea.sflag [#allocation4], %s257
        %s259 = sand.u32 %s135, 1
        %s260 = smul.addr %s259, 384
        %s261 = scalar_lea.vmem [#allocation8], %s260
        %s262 = smul.u32 16, %s27
        %s263 = smul.u32 16, %s27
        %v264 = vld [vmem:[%s229] sm:$0xff]
        %v265 = vld [vmem:[%s229 + $0x8] sm:$0xff]
        %v266 = vld [vmem:[%s229 + $0x10] sm:$0xff]
        %v267 = vld [vmem:[%s229 + $0x18] sm:$0xff]
        %v268 = vld [vmem:[%s229 + $0x20] sm:$0xff]
        %v269 = vld [vmem:[%s229 + $0x28] sm:$0xff]
        %v270 = vld [vmem:[%s229 + $0x30] sm:$0xff]
        %v271 = vld [vmem:[%s229 + $0x38] sm:$0xff]
        %v272 = vld [vmem:[%s229 + $0x40] sm:$0xff]
        %v273 = vld [vmem:[%s229 + $0x48] sm:$0xff]
        %v274 = vld [vmem:[%s229 + $0x50] sm:$0xff]
        %v275 = vld [vmem:[%s229 + $0x58] sm:$0xff]
        %v276 = vld [vmem:[%s229 + $0x60] sm:$0xff]
        %v277 = vld [vmem:[%s229 + $0x68] sm:$0xff]
        %v278 = vld [vmem:[%s229 + $0x70] sm:$0xff]
        %v279 = vld [vmem:[%s229 + $0x78] sm:$0xff]
        %v280 = vld [vmem:[%s229 + $0x80] sm:$0xff]
        %v281 = vld [vmem:[%s229 + $0x88] sm:$0xff]
        %v282 = vld [vmem:[%s229 + $0x90] sm:$0xff]
        %v283 = vld [vmem:[%s229 + $0x98] sm:$0xff]
        %v284 = vld [vmem:[%s229 + $0xa0] sm:$0xff]
        %v285 = vld [vmem:[%s229 + $0xa8] sm:$0xff]
        %v286 = vld [vmem:[%s229 + $0xb0] sm:$0xff]
        %v287 = vld [vmem:[%s229 + $0xb8] sm:$0xff]
        %v288 = vld [vmem:[%s229 + $0xc0] sm:$0xff]
        %v289 = vld [vmem:[%s229 + $0xc8] sm:$0xff]
        %v290 = vld [vmem:[%s229 + $0xd0] sm:$0xff]
        %v291 = vld [vmem:[%s229 + $0xd8] sm:$0xff]
        %v292 = vld [vmem:[%s229 + $0xe0] sm:$0xff]
        %v293 = vld [vmem:[%s229 + $0xe8] sm:$0xff]
        %v294 = vld [vmem:[%s229 + $0xf0] sm:$0xff]
        %v295 = vld [vmem:[%s229 + $0xf8] sm:$0xff]
        %v296 = vld [vmem:[#allocation5] sm:$0x3]
        %v297 = vld [vmem:[%s2] sm:$0x3]
        %v298 = vadd.f32 %v264, %v265
        %299 = vadd.xlane.f32.xlu0 %v298
        %v300 = vpop.xlane.xlu0 %299
        %v301 = vadd.f32 %v266, %v267
        %302 = vadd.xlane.f32.xlu0 %v301
        %v303 = vpop.xlane.xlu0 %302
        %v304 = vadd.f32 %v268, %v269
        %305 = vadd.xlane.f32.xlu0 %v304
        %v306 = vpop.xlane.xlu0 %305
        %v307 = vadd.f32 %v270, %v271
        %308 = vadd.xlane.f32.xlu0 %v307
        %v309 = vpop.xlane.xlu0 %308
        %v310 = vadd.f32 %v272, %v273
        %311 = vadd.xlane.f32.xlu0 %v310
        %v312 = vpop.xlane.xlu0 %311
        %v313 = vadd.f32 %v274, %v275
        %314 = vadd.xlane.f32.xlu0 %v313
        %v315 = vpop.xlane.xlu0 %314
        %v316 = vadd.f32 %v276, %v277
        %317 = vadd.xlane.f32.xlu0 %v316
        %v318 = vpop.xlane.xlu0 %317
        %v319 = vadd.f32 %v278, %v279
        %320 = vadd.xlane.f32.xlu0 %v319
        %v321 = vpop.xlane.xlu0 %320
        %v322 = vadd.f32 %v280, %v281
        %323 = vadd.xlane.f32.xlu0 %v322
        %v324 = vpop.xlane.xlu0 %323
        %v325 = vadd.f32 %v282, %v283
        %326 = vadd.xlane.f32.xlu0 %v325
        %v327 = vpop.xlane.xlu0 %326
        %v328 = vadd.f32 %v284, %v285
        %329 = vadd.xlane.f32.xlu0 %v328
        %v330 = vpop.xlane.xlu0 %329
        %v331 = vadd.f32 %v286, %v287
        %332 = vadd.xlane.f32.xlu0 %v331
        %v333 = vpop.xlane.xlu0 %332
        %v334 = vadd.f32 %v288, %v289
        %335 = vadd.xlane.f32.xlu0 %v334
        %v336 = vpop.xlane.xlu0 %335
        %v337 = vadd.f32 %v290, %v291
        %338 = vadd.xlane.f32.xlu0 %v337
        %v339 = vpop.xlane.xlu0 %338
        %v340 = vadd.f32 %v292, %v293
        %341 = vadd.xlane.f32.xlu0 %v340
        %v342 = vpop.xlane.xlu0 %341
        %v343 = vadd.f32 %v294, %v295
        %344 = vadd.xlane.f32.xlu0 %v343
        %v345 = vpop.xlane.xlu0 %344
        %v346 = vrcp.pop 256.0
        %v347 = vmul.f32 %v300, %v346
        %v348 = vmul.f32 %v303, %v346
        %v349 = vmul.f32 %v306, %v346
        %v350 = vmul.f32 %v309, %v346
        %v351 = vmul.f32 %v312, %v346
        %v352 = vmul.f32 %v315, %v346
        %v353 = vmul.f32 %v318, %v346
        %v354 = vmul.f32 %v321, %v346
        %v355 = vmul.f32 %v324, %v346
        %v356 = vmul.f32 %v327, %v346
        %v357 = vmul.f32 %v330, %v346
        %v358 = vmul.f32 %v333, %v346
        %v359 = vmul.f32 %v336, %v346
        %v360 = vmul.f32 %v339, %v346
        %v361 = vmul.f32 %v342, %v346
        %v362 = vmul.f32 %v345, %v346
        %v363 = vsub.f32 %v264, %v347
        %v364 = vsub.f32 %v265, %v347
        %v365 = vsub.f32 %v266, %v348
        %v366 = vsub.f32 %v267, %v348
        %v367 = vsub.f32 %v268, %v349
        %v368 = vsub.f32 %v269, %v349
        %v369 = vsub.f32 %v270, %v350
        %v370 = vsub.f32 %v271, %v350
        %v371 = vsub.f32 %v272, %v351
        %v372 = vsub.f32 %v273, %v351
        %v373 = vsub.f32 %v274, %v352
        %v374 = vsub.f32 %v275, %v352
        %v375 = vsub.f32 %v276, %v353
        %v376 = vsub.f32 %v277, %v353
        %v377 = vsub.f32 %v278, %v354
        %v378 = vsub.f32 %v279, %v354
        %v379 = vsub.f32 %v280, %v355
        %v380 = vsub.f32 %v281, %v355
        %v381 = vsub.f32 %v282, %v356
        %v382 = vsub.f32 %v283, %v356
        %v383 = vsub.f32 %v284, %v357
        %v384 = vsub.f32 %v285, %v357
        %v385 = vsub.f32 %v286, %v358
        %v386 = vsub.f32 %v287, %v358
        %v387 = vsub.f32 %v288, %v359
        %v388 = vsub.f32 %v289, %v359
        %v389 = vsub.f32 %v290, %v360
        %v390 = vsub.f32 %v291, %v360
        %v391 = vsub.f32 %v292, %v361
        %v392 = vsub.f32 %v293, %v361
        %v393 = vsub.f32 %v294, %v362
        %v394 = vsub.f32 %v295, %v362
        %v395 = vmul.f32 %v363, %v363
        %v396 = vmul.f32 %v364, %v364
        %v397 = vmul.f32 %v365, %v365
        %v398 = vmul.f32 %v366, %v366
        %v399 = vmul.f32 %v367, %v367
        %v400 = vmul.f32 %v368, %v368
        %v401 = vmul.f32 %v369, %v369
        %v402 = vmul.f32 %v370, %v370
        %v403 = vmul.f32 %v371, %v371
        %v404 = vmul.f32 %v372, %v372
        %v405 = vmul.f32 %v373, %v373
        %v406 = vmul.f32 %v374, %v374
        %v407 = vmul.f32 %v375, %v375
        %v408 = vmul.f32 %v376, %v376
        %v409 = vmul.f32 %v377, %v377
        %v410 = vmul.f32 %v378, %v378
        %v411 = vmul.f32 %v379, %v379
        %v412 = vmul.f32 %v380, %v380
        %v413 = vmul.f32 %v381, %v381
        %v414 = vmul.f32 %v382, %v382
        %v415 = vmul.f32 %v383, %v383
        %v416 = vmul.f32 %v384, %v384
        %v417 = vmul.f32 %v385, %v385
        %v418 = vmul.f32 %v386, %v386
        %v419 = vmul.f32 %v387, %v387
        %v420 = vmul.f32 %v388, %v388
        %v421 = vmul.f32 %v389, %v389
        %v422 = vmul.f32 %v390, %v390
        %v423 = vmul.f32 %v391, %v391
        %v424 = vmul.f32 %v392, %v392
        %v425 = vmul.f32 %v393, %v393
        %v426 = vmul.f32 %v394, %v394
        %v427 = vadd.f32 %v395, %v396
        %428 = vadd.xlane.f32.xlu0 %v427
        %v429 = vpop.xlane.xlu0 %428
        %v430 = vadd.f32 %v397, %v398
        %431 = vadd.xlane.f32.xlu0 %v430
        %v432 = vpop.xlane.xlu0 %431
        %v433 = vadd.f32 %v399, %v400
        %434 = vadd.xlane.f32.xlu0 %v433
        %v435 = vpop.xlane.xlu0 %434
        %v436 = vadd.f32 %v401, %v402
        %437 = vadd.xlane.f32.xlu0 %v436
        %v438 = vpop.xlane.xlu0 %437
        %v439 = vadd.f32 %v403, %v404
        %440 = vadd.xlane.f32.xlu0 %v439
        %v441 = vpop.xlane.xlu0 %440
        %v442 = vadd.f32 %v405, %v406
        %443 = vadd.xlane.f32.xlu0 %v442
        %v444 = vpop.xlane.xlu0 %443
        %v445 = vadd.f32 %v407, %v408
        %446 = vadd.xlane.f32.xlu0 %v445
        %v447 = vpop.xlane.xlu0 %446
        %v448 = vadd.f32 %v409, %v410
        %449 = vadd.xlane.f32.xlu0 %v448
        %v450 = vpop.xlane.xlu0 %449
        %v451 = vadd.f32 %v411, %v412
        %452 = vadd.xlane.f32.xlu0 %v451
        %v453 = vpop.xlane.xlu0 %452
        %v454 = vadd.f32 %v413, %v414
        %455 = vadd.xlane.f32.xlu0 %v454
        %v456 = vpop.xlane.xlu0 %455
        %v457 = vadd.f32 %v415, %v416
        %458 = vadd.xlane.f32.xlu0 %v457
        %v459 = vpop.xlane.xlu0 %458
        %v460 = vadd.f32 %v417, %v418
        %461 = vadd.xlane.f32.xlu0 %v460
        %v462 = vpop.xlane.xlu0 %461
        %v463 = vadd.f32 %v419, %v420
        %464 = vadd.xlane.f32.xlu0 %v463
        %v465 = vpop.xlane.xlu0 %464
        %v466 = vadd.f32 %v421, %v422
        %467 = vadd.xlane.f32.xlu0 %v466
        %v468 = vpop.xlane.xlu0 %467
        %v469 = vadd.f32 %v423, %v424
        %470 = vadd.xlane.f32.xlu0 %v469
        %v471 = vpop.xlane.xlu0 %470
        %v472 = vadd.f32 %v425, %v426
        %473 = vadd.xlane.f32.xlu0 %v472
        %v474 = vpop.xlane.xlu0 %473
        %v475 = vmul.f32 %v429, %v346
        %v476 = vmul.f32 %v432, %v346
        %v477 = vmul.f32 %v435, %v346
        %v478 = vmul.f32 %v438, %v346
        %v479 = vmul.f32 %v441, %v346
        %v480 = vmul.f32 %v444, %v346
        %v481 = vmul.f32 %v447, %v346
        %v482 = vmul.f32 %v450, %v346
        %v483 = vmul.f32 %v453, %v346
        %v484 = vmul.f32 %v456, %v346
        %v485 = vmul.f32 %v459, %v346
        %v486 = vmul.f32 %v462, %v346
        %v487 = vmul.f32 %v465, %v346
        %v488 = vmul.f32 %v468, %v346
        %v489 = vmul.f32 %v471, %v346
        %v490 = vmul.f32 %v474, %v346
        %v491 = vadd.f32 %v475, 1e-05
        %v492 = vadd.f32 %v476, 1e-05
        %v493 = vadd.f32 %v477, 1e-05
        %v494 = vadd.f32 %v478, 1e-05
        %v495 = vadd.f32 %v479, 1e-05
        %v496 = vadd.f32 %v480, 1e-05
        %v497 = vadd.f32 %v481, 1e-05
        %v498 = vadd.f32 %v482, 1e-05
        %v499 = vadd.f32 %v483, 1e-05
        %v500 = vadd.f32 %v484, 1e-05
        %v501 = vadd.f32 %v485, 1e-05
        %v502 = vadd.f32 %v486, 1e-05
        %v503 = vadd.f32 %v487, 1e-05
        %v504 = vadd.f32 %v488, 1e-05
        %v505 = vadd.f32 %v489, 1e-05
        %v506 = vadd.f32 %v490, 1e-05
        %v507 = vrsqrt.pop %v491
        %v508 = vrsqrt.pop %v492
        %v509 = vrsqrt.pop %v493
        %v510 = vrsqrt.pop %v494
        %v511 = vrsqrt.pop %v495
        %v512 = vrsqrt.pop %v496
        %v513 = vrsqrt.pop %v497
        %v514 = vrsqrt.pop %v498
        %v515 = vrsqrt.pop %v499
        %v516 = vrsqrt.pop %v500
        %v517 = vrsqrt.pop %v501
        %v518 = vrsqrt.pop %v502
        %v519 = vrsqrt.pop %v503
        %v520 = vrsqrt.pop %v504
        %v521 = vrsqrt.pop %v505
        %v522 = vrsqrt.pop %v506
        %v523 = vmul.f32 %v363, %v507
        %v524 = vmul.f32 %v364, %v507
        %v525 = vmul.f32 %v365, %v508
        %v526 = vmul.f32 %v366, %v508
        %v527 = vmul.f32 %v367, %v509
        %v528 = vmul.f32 %v368, %v509
        %v529 = vmul.f32 %v369, %v510
        %v530 = vmul.f32 %v370, %v510
        %v531 = vmul.f32 %v371, %v511
        %v532 = vmul.f32 %v372, %v511
        %v533 = vmul.f32 %v373, %v512
        %v534 = vmul.f32 %v374, %v512
        %v535 = vmul.f32 %v375, %v513
        %v536 = vmul.f32 %v376, %v513
        %v537 = vmul.f32 %v377, %v514
        %v538 = vmul.f32 %v378, %v514
        %v539 = vmul.f32 %v379, %v515
        %v540 = vmul.f32 %v380, %v515
        %v541 = vmul.f32 %v381, %v516
        %v542 = vmul.f32 %v382, %v516
        %v543 = vmul.f32 %v383, %v517
        %v544 = vmul.f32 %v384, %v517
        %v545 = vmul.f32 %v385, %v518
        %v546 = vmul.f32 %v386, %v518
        %v547 = vmul.f32 %v387, %v519
        %v548 = vmul.f32 %v388, %v519
        %v549 = vmul.f32 %v389, %v520
        %v550 = vmul.f32 %v390, %v520
        %v551 = vmul.f32 %v391, %v521
        %v552 = vmul.f32 %v392, %v521
        %v553 = vmul.f32 %v393, %v522
        %v554 = vmul.f32 %v394, %v522
        %v556 = vlaneseq
        %v557 = vshrl.u32 %v556, 7
        %v558 = vsub.s32 0, %v557
        %v559 = vrot.slane %v296, %v558
        %v560 = vlaneseq
        %v561 = vshrl.u32 %v560, 7
        %v562 = vsub.s32 1, %v561
        %v563 = vrot.slane %v296, %v562
        %v566 = vmul.f32 %v523, %v559
        %v567 = vmul.f32 %v524, %v563
        %v568 = vmul.f32 %v525, %v559
        %v569 = vmul.f32 %v526, %v563
        %v570 = vmul.f32 %v527, %v559
        %v571 = vmul.f32 %v528, %v563
        %v572 = vmul.f32 %v529, %v559
        %v573 = vmul.f32 %v530, %v563
        %v574 = vmul.f32 %v531, %v559
        %v575 = vmul.f32 %v532, %v563
        %v576 = vmul.f32 %v533, %v559
        %v577 = vmul.f32 %v534, %v563
        %v578 = vmul.f32 %v535, %v559
        %v579 = vmul.f32 %v536, %v563
        %v580 = vmul.f32 %v537, %v559
        %v581 = vmul.f32 %v538, %v563
        %v582 = vmul.f32 %v539, %v559
        %v583 = vmul.f32 %v540, %v563
        %v584 = vmul.f32 %v541, %v559
        %v585 = vmul.f32 %v542, %v563
        %v586 = vmul.f32 %v543, %v559
        %v587 = vmul.f32 %v544, %v563
        %v588 = vmul.f32 %v545, %v559
        %v589 = vmul.f32 %v546, %v563
        %v590 = vmul.f32 %v547, %v559
        %v591 = vmul.f32 %v548, %v563
        %v592 = vmul.f32 %v549, %v559
        %v593 = vmul.f32 %v550, %v563
        %v594 = vmul.f32 %v551, %v559
        %v595 = vmul.f32 %v552, %v563
        %v596 = vmul.f32 %v553, %v559
        %v597 = vmul.f32 %v554, %v563
        %v599 = vlaneseq
        %v600 = vshrl.u32 %v599, 7
        %v601 = vsub.s32 0, %v600
        %v602 = vrot.slane %v297, %v601
        %v603 = vlaneseq
        %v604 = vshrl.u32 %v603, 7
        %v605 = vsub.s32 1, %v604
        %v606 = vrot.slane %v297, %v605
        %v609 = vadd.f32 %v566, %v602
        %v610 = vadd.f32 %v567, %v606
        %v611 = vadd.f32 %v568, %v602
        %v612 = vadd.f32 %v569, %v606
        %v613 = vadd.f32 %v570, %v602
        %v614 = vadd.f32 %v571, %v606
        %v615 = vadd.f32 %v572, %v602
        %v616 = vadd.f32 %v573, %v606
        %v617 = vadd.f32 %v574, %v602
        %v618 = vadd.f32 %v575, %v606
        %v619 = vadd.f32 %v576, %v602
        %v620 = vadd.f32 %v577, %v606
        %v621 = vadd.f32 %v578, %v602
        %v622 = vadd.f32 %v579, %v606
        %v623 = vadd.f32 %v580, %v602
        %v624 = vadd.f32 %v581, %v606
        %v625 = vadd.f32 %v582, %v602
        %v626 = vadd.f32 %v583, %v606
        %v627 = vadd.f32 %v584, %v602
        %v628 = vadd.f32 %v585, %v606
        %v629 = vadd.f32 %v586, %v602
        %v630 = vadd.f32 %v587, %v606
        %v631 = vadd.f32 %v588, %v602
        %v632 = vadd.f32 %v589, %v606
        %v633 = vadd.f32 %v590, %v602
        %v634 = vadd.f32 %v591, %v606
        %v635 = vadd.f32 %v592, %v602
        %v636 = vadd.f32 %v593, %v606
        %v637 = vadd.f32 %v594, %v602
        %v638 = vadd.f32 %v595, %v606
        %v639 = vadd.f32 %v596, %v602
        %v640 = vadd.f32 %v597, %v606
        %v641 = vpack.c.bf16 %v611, %v609
        %v642 = vpack.c.bf16 %v612, %v610
        %v643 = vpack.c.bf16 %v615, %v613
        %v644 = vpack.c.bf16 %v616, %v614
        %v645 = vpack.c.bf16 %v619, %v617
        %v646 = vpack.c.bf16 %v620, %v618
        %v647 = vpack.c.bf16 %v623, %v621
        %v648 = vpack.c.bf16 %v624, %v622
        %v649 = vpack.c.bf16 %v627, %v625
        %v650 = vpack.c.bf16 %v628, %v626
        %v651 = vpack.c.bf16 %v631, %v629
        %v652 = vpack.c.bf16 %v632, %v630
        %v653 = vpack.c.bf16 %v635, %v633
        %v654 = vpack.c.bf16 %v636, %v634
        %v655 = vpack.c.bf16 %v639, %v637
        %v656 = vpack.c.bf16 %v640, %v638
        %v657 = vld [vmem:[#allocation7] sm:$0xff]
        %v658 = vld [vmem:[#allocation7 + $0x8] sm:$0xff]
        %v659 = vld [vmem:[#allocation7 + $0x10] sm:$0xff]
        %v660 = vld [vmem:[#allocation7 + $0x18] sm:$0xff]
        %v661 = vld [vmem:[#allocation7 + $0x20] sm:$0xff]
        %v662 = vld [vmem:[#allocation7 + $0x28] sm:$0xff]
        %v663 = vld [vmem:[#allocation7 + $0x30] sm:$0xff]
        %v664 = vld [vmem:[#allocation7 + $0x38] sm:$0xff]
        %v665 = vld [vmem:[#allocation7 + $0x40] sm:$0xff]
        %v666 = vld [vmem:[#allocation7 + $0x48] sm:$0xff]
        %v667 = vld [vmem:[#allocation7 + $0x50] sm:$0xff]
        %v668 = vld [vmem:[#allocation7 + $0x58] sm:$0xff]
        %v669 = vld [vmem:[#allocation7 + $0x60] sm:$0xff]
        %v670 = vld [vmem:[#allocation7 + $0x68] sm:$0xff]
        %v671 = vld [vmem:[#allocation7 + $0x70] sm:$0xff]
        %v672 = vld [vmem:[#allocation7 + $0x78] sm:$0xff]
        %v673 = vld [vmem:[#allocation7 + $0x80] sm:$0xff]
        %v674 = vld [vmem:[#allocation7 + $0x88] sm:$0xff]
        %v675 = vld [vmem:[#allocation7 + $0x90] sm:$0xff]
        %v676 = vld [vmem:[#allocation7 + $0x98] sm:$0xff]
        %v677 = vld [vmem:[#allocation7 + $0xa0] sm:$0xff]
        %v678 = vld [vmem:[#allocation7 + $0xa8] sm:$0xff]
        %v679 = vld [vmem:[#allocation7 + $0xb0] sm:$0xff]
        %v680 = vld [vmem:[#allocation7 + $0xb8] sm:$0xff]
        %v681 = vld [vmem:[#allocation7 + $0xc0] sm:$0xff]
        %v682 = vld [vmem:[#allocation7 + $0xc8] sm:$0xff]
        %v683 = vld [vmem:[#allocation7 + $0xd0] sm:$0xff]
        %v684 = vld [vmem:[#allocation7 + $0xd8] sm:$0xff]
        %v685 = vld [vmem:[#allocation7 + $0xe0] sm:$0xff]
        %v686 = vld [vmem:[#allocation7 + $0xe8] sm:$0xff]
        %v687 = vld [vmem:[#allocation7 + $0xf0] sm:$0xff]
        %v688 = vld [vmem:[#allocation7 + $0xf8] sm:$0xff]
        %v689 = vld [vmem:[#allocation7 + $0x100] sm:$0xff]
        %v690 = vld [vmem:[#allocation7 + $0x108] sm:$0xff]
        %v691 = vld [vmem:[#allocation7 + $0x110] sm:$0xff]
        %v692 = vld [vmem:[#allocation7 + $0x118] sm:$0xff]
        %v693 = vld [vmem:[#allocation7 + $0x120] sm:$0xff]
        %v694 = vld [vmem:[#allocation7 + $0x128] sm:$0xff]
        %v695 = vld [vmem:[#allocation7 + $0x130] sm:$0xff]
        %v696 = vld [vmem:[#allocation7 + $0x138] sm:$0xff]
        %v697 = vld [vmem:[#allocation7 + $0x140] sm:$0xff]
        %v698 = vld [vmem:[#allocation7 + $0x148] sm:$0xff]
        %v699 = vld [vmem:[#allocation7 + $0x150] sm:$0xff]
        %v700 = vld [vmem:[#allocation7 + $0x158] sm:$0xff]
        %v701 = vld [vmem:[#allocation7 + $0x160] sm:$0xff]
        %v702 = vld [vmem:[#allocation7 + $0x168] sm:$0xff]
        %v703 = vld [vmem:[#allocation7 + $0x170] sm:$0xff]
        %v704 = vld [vmem:[#allocation7 + $0x178] sm:$0xff]
        %v705 = vld [vmem:[#allocation7 + $0x180] sm:$0xff]
        %v706 = vld [vmem:[#allocation7 + $0x188] sm:$0xff]
        %v707 = vld [vmem:[#allocation7 + $0x190] sm:$0xff]
        %v708 = vld [vmem:[#allocation7 + $0x198] sm:$0xff]
        %v709 = vld [vmem:[#allocation7 + $0x1a0] sm:$0xff]
        %v710 = vld [vmem:[#allocation7 + $0x1a8] sm:$0xff]
        %v711 = vld [vmem:[#allocation7 + $0x1b0] sm:$0xff]
        %v712 = vld [vmem:[#allocation7 + $0x1b8] sm:$0xff]
        %v713 = vld [vmem:[#allocation7 + $0x1c0] sm:$0xff]
        %v714 = vld [vmem:[#allocation7 + $0x1c8] sm:$0xff]
        %v715 = vld [vmem:[#allocation7 + $0x1d0] sm:$0xff]
        %v716 = vld [vmem:[#allocation7 + $0x1d8] sm:$0xff]
        %v717 = vld [vmem:[#allocation7 + $0x1e0] sm:$0xff]
        %v718 = vld [vmem:[#allocation7 + $0x1e8] sm:$0xff]
        %v719 = vld [vmem:[#allocation7 + $0x1f0] sm:$0xff]
        %v720 = vld [vmem:[#allocation7 + $0x1f8] sm:$0xff]
        %v721 = vld [vmem:[#allocation7 + $0x200] sm:$0xff]
        %v722 = vld [vmem:[#allocation7 + $0x208] sm:$0xff]
        %v723 = vld [vmem:[#allocation7 + $0x210] sm:$0xff]
        %v724 = vld [vmem:[#allocation7 + $0x218] sm:$0xff]
        %v725 = vld [vmem:[#allocation7 + $0x220] sm:$0xff]
        %v726 = vld [vmem:[#allocation7 + $0x228] sm:$0xff]
        %v727 = vld [vmem:[#allocation7 + $0x230] sm:$0xff]
        %v728 = vld [vmem:[#allocation7 + $0x238] sm:$0xff]
        %v729 = vld [vmem:[#allocation7 + $0x240] sm:$0xff]
        %v730 = vld [vmem:[#allocation7 + $0x248] sm:$0xff]
        %v731 = vld [vmem:[#allocation7 + $0x250] sm:$0xff]
        %v732 = vld [vmem:[#allocation7 + $0x258] sm:$0xff]
        %v733 = vld [vmem:[#allocation7 + $0x260] sm:$0xff]
        %v734 = vld [vmem:[#allocation7 + $0x268] sm:$0xff]
        %v735 = vld [vmem:[#allocation7 + $0x270] sm:$0xff]
        %v736 = vld [vmem:[#allocation7 + $0x278] sm:$0xff]
        %v737 = vld [vmem:[#allocation7 + $0x280] sm:$0xff]
        %v738 = vld [vmem:[#allocation7 + $0x288] sm:$0xff]
        %v739 = vld [vmem:[#allocation7 + $0x290] sm:$0xff]
        %v740 = vld [vmem:[#allocation7 + $0x298] sm:$0xff]
        %v741 = vld [vmem:[#allocation7 + $0x2a0] sm:$0xff]
        %v742 = vld [vmem:[#allocation7 + $0x2a8] sm:$0xff]
        %v743 = vld [vmem:[#allocation7 + $0x2b0] sm:$0xff]
        %v744 = vld [vmem:[#allocation7 + $0x2b8] sm:$0xff]
        %v745 = vld [vmem:[#allocation7 + $0x2c0] sm:$0xff]
        %v746 = vld [vmem:[#allocation7 + $0x2c8] sm:$0xff]
        %v747 = vld [vmem:[#allocation7 + $0x2d0] sm:$0xff]
        %v748 = vld [vmem:[#allocation7 + $0x2d8] sm:$0xff]
        %v749 = vld [vmem:[#allocation7 + $0x2e0] sm:$0xff]
        %v750 = vld [vmem:[#allocation7 + $0x2e8] sm:$0xff]
        %v751 = vld [vmem:[#allocation7 + $0x2f0] sm:$0xff]
        %v752 = vld [vmem:[#allocation7 + $0x2f8] sm:$0xff]
        %v849 = vunpack.c.l.b16 %v657
        %v850 = vunpack.c.h.b16 %v657
        %v851 = vunpack.c.l.b16 %v658
        %v852 = vunpack.c.h.b16 %v658
        %v853 = vunpack.c.l.b16 %v659
        %v854 = vunpack.c.h.b16 %v659
        %v855 = vunpack.c.l.b16 %v660
        %v856 = vunpack.c.h.b16 %v660
        %v857 = vunpack.c.l.b16 %v661
        %v858 = vunpack.c.h.b16 %v661
        %v859 = vunpack.c.l.b16 %v662
        %v860 = vunpack.c.h.b16 %v662
        %v861 = vunpack.c.l.b16 %v663
        %v862 = vunpack.c.h.b16 %v663
        %v863 = vunpack.c.l.b16 %v664
        %v864 = vunpack.c.h.b16 %v664
        %v865 = vunpack.c.l.b16 %v665
        %v866 = vunpack.c.h.b16 %v665
        %v867 = vunpack.c.l.b16 %v666
        %v868 = vunpack.c.h.b16 %v666
        %v869 = vunpack.c.l.b16 %v667
        %v870 = vunpack.c.h.b16 %v667
        %v871 = vunpack.c.l.b16 %v668
        %v872 = vunpack.c.h.b16 %v668
        %v873 = vunpack.c.l.b16 %v669
        %v874 = vunpack.c.h.b16 %v669
        %v875 = vunpack.c.l.b16 %v670
        %v876 = vunpack.c.h.b16 %v670
        %v877 = vunpack.c.l.b16 %v671
        %v878 = vunpack.c.h.b16 %v671
        %v879 = vunpack.c.l.b16 %v672
        %v880 = vunpack.c.h.b16 %v672
        %v881 = vunpack.c.l.b16 %v673
        %v882 = vunpack.c.h.b16 %v673
        %v883 = vunpack.c.l.b16 %v674
        %v884 = vunpack.c.h.b16 %v674
        %v885 = vunpack.c.l.b16 %v675
        %v886 = vunpack.c.h.b16 %v675
        %v887 = vunpack.c.l.b16 %v676
        %v888 = vunpack.c.h.b16 %v676
        %v889 = vunpack.c.l.b16 %v677
        %v890 = vunpack.c.h.b16 %v677
        %v891 = vunpack.c.l.b16 %v678
        %v892 = vunpack.c.h.b16 %v678
        %v893 = vunpack.c.l.b16 %v679
        %v894 = vunpack.c.h.b16 %v679
        %v895 = vunpack.c.l.b16 %v680
        %v896 = vunpack.c.h.b16 %v680
        %v897 = vunpack.c.l.b16 %v681
        %v898 = vunpack.c.h.b16 %v681
        %v899 = vunpack.c.l.b16 %v682
        %v900 = vunpack.c.h.b16 %v682
        %v901 = vunpack.c.l.b16 %v683
        %v902 = vunpack.c.h.b16 %v683
        %v903 = vunpack.c.l.b16 %v684
        %v904 = vunpack.c.h.b16 %v684
        %v905 = vunpack.c.l.b16 %v685
        %v906 = vunpack.c.h.b16 %v685
        %v907 = vunpack.c.l.b16 %v686
        %v908 = vunpack.c.h.b16 %v686
        %v909 = vunpack.c.l.b16 %v687
        %v910 = vunpack.c.h.b16 %v687
        %v911 = vunpack.c.l.b16 %v688
        %v912 = vunpack.c.h.b16 %v688
        %v913 = vunpack.c.l.b16 %v689
        %v914 = vunpack.c.h.b16 %v689
        %v915 = vunpack.c.l.b16 %v690
        %v916 = vunpack.c.h.b16 %v690
        %v917 = vunpack.c.l.b16 %v691
        %v918 = vunpack.c.h.b16 %v691
        %v919 = vunpack.c.l.b16 %v692
        %v920 = vunpack.c.h.b16 %v692
        %v921 = vunpack.c.l.b16 %v693
        %v922 = vunpack.c.h.b16 %v693
        %v923 = vunpack.c.l.b16 %v694
        %v924 = vunpack.c.h.b16 %v694
        %v925 = vunpack.c.l.b16 %v695
        %v926 = vunpack.c.h.b16 %v695
        %v927 = vunpack.c.l.b16 %v696
        %v928 = vunpack.c.h.b16 %v696
        %v929 = vunpack.c.l.b16 %v697
        %v930 = vunpack.c.h.b16 %v697
        %v931 = vunpack.c.l.b16 %v698
        %v932 = vunpack.c.h.b16 %v698
        %v933 = vunpack.c.l.b16 %v699
        %v934 = vunpack.c.h.b16 %v699
        %v935 = vunpack.c.l.b16 %v700
        %v936 = vunpack.c.h.b16 %v700
        %v937 = vunpack.c.l.b16 %v701
        %v938 = vunpack.c.h.b16 %v701
        %v939 = vunpack.c.l.b16 %v702
        %v940 = vunpack.c.h.b16 %v702
        %v941 = vunpack.c.l.b16 %v703
        %v942 = vunpack.c.h.b16 %v703
        %v943 = vunpack.c.l.b16 %v704
        %v944 = vunpack.c.h.b16 %v704
        %v945 = vunpack.c.l.b16 %v705
        %v946 = vunpack.c.h.b16 %v705
        %v947 = vunpack.c.l.b16 %v706
        %v948 = vunpack.c.h.b16 %v706
        %v949 = vunpack.c.l.b16 %v707
        %v950 = vunpack.c.h.b16 %v707
        %v951 = vunpack.c.l.b16 %v708
        %v952 = vunpack.c.h.b16 %v708
        %v953 = vunpack.c.l.b16 %v709
        %v954 = vunpack.c.h.b16 %v709
        %v955 = vunpack.c.l.b16 %v710
        %v956 = vunpack.c.h.b16 %v710
        %v957 = vunpack.c.l.b16 %v711
        %v958 = vunpack.c.h.b16 %v711
        %v959 = vunpack.c.l.b16 %v712
        %v960 = vunpack.c.h.b16 %v712
        %v961 = vunpack.c.l.b16 %v713
        %v962 = vunpack.c.h.b16 %v713
        %v963 = vunpack.c.l.b16 %v714
        %v964 = vunpack.c.h.b16 %v714
        %v965 = vunpack.c.l.b16 %v715
        %v966 = vunpack.c.h.b16 %v715
        %v967 = vunpack.c.l.b16 %v716
        %v968 = vunpack.c.h.b16 %v716
        %v969 = vunpack.c.l.b16 %v717
        %v970 = vunpack.c.h.b16 %v717
        %v971 = vunpack.c.l.b16 %v718
        %v972 = vunpack.c.h.b16 %v718
        %v973 = vunpack.c.l.b16 %v719
        %v974 = vunpack.c.h.b16 %v719
        %v975 = vunpack.c.l.b16 %v720
        %v976 = vunpack.c.h.b16 %v720
        %v977 = vunpack.c.l.b16 %v721
        %v978 = vunpack.c.h.b16 %v721
        %v979 = vunpack.c.l.b16 %v722
        %v980 = vunpack.c.h.b16 %v722
        %v981 = vunpack.c.l.b16 %v723
        %v982 = vunpack.c.h.b16 %v723
        %v983 = vunpack.c.l.b16 %v724
        %v984 = vunpack.c.h.b16 %v724
        %v985 = vunpack.c.l.b16 %v725
        %v986 = vunpack.c.h.b16 %v725
        %v987 = vunpack.c.l.b16 %v726
        %v988 = vunpack.c.h.b16 %v726
        %v989 = vunpack.c.l.b16 %v727
        %v990 = vunpack.c.h.b16 %v727
        %v991 = vunpack.c.l.b16 %v728
        %v992 = vunpack.c.h.b16 %v728
        %v993 = vunpack.c.l.b16 %v729
        %v994 = vunpack.c.h.b16 %v729
        %v995 = vunpack.c.l.b16 %v730
        %v996 = vunpack.c.h.b16 %v730
        %v997 = vunpack.c.l.b16 %v731
        %v998 = vunpack.c.h.b16 %v731
        %v999 = vunpack.c.l.b16 %v732
        %v1000 = vunpack.c.h.b16 %v732
        %v1001 = vunpack.c.l.b16 %v733
        %v1002 = vunpack.c.h.b16 %v733
        %v1003 = vunpack.c.l.b16 %v734
        %v1004 = vunpack.c.h.b16 %v734
        %v1005 = vunpack.c.l.b16 %v735
        %v1006 = vunpack.c.h.b16 %v735
        %v1007 = vunpack.c.l.b16 %v736
        %v1008 = vunpack.c.h.b16 %v736
        %v1009 = vunpack.c.l.b16 %v737
        %v1010 = vunpack.c.h.b16 %v737
        %v1011 = vunpack.c.l.b16 %v738
        %v1012 = vunpack.c.h.b16 %v738
        %v1013 = vunpack.c.l.b16 %v739
        %v1014 = vunpack.c.h.b16 %v739
        %v1015 = vunpack.c.l.b16 %v740
        %v1016 = vunpack.c.h.b16 %v740
        %v1017 = vunpack.c.l.b16 %v741
        %v1018 = vunpack.c.h.b16 %v741
        %v1019 = vunpack.c.l.b16 %v742
        %v1020 = vunpack.c.h.b16 %v742
        %v1021 = vunpack.c.l.b16 %v743
        %v1022 = vunpack.c.h.b16 %v743
        %v1023 = vunpack.c.l.b16 %v744
        %v1024 = vunpack.c.h.b16 %v744
        %v1025 = vunpack.c.l.b16 %v745
        %v1026 = vunpack.c.h.b16 %v745
        %v1027 = vunpack.c.l.b16 %v746
        %v1028 = vunpack.c.h.b16 %v746
        %v1029 = vunpack.c.l.b16 %v747
        %v1030 = vunpack.c.h.b16 %v747
        %v1031 = vunpack.c.l.b16 %v748
        %v1032 = vunpack.c.h.b16 %v748
        %v1033 = vunpack.c.l.b16 %v749
        %v1034 = vunpack.c.h.b16 %v749
        %v1035 = vunpack.c.l.b16 %v750
        %v1036 = vunpack.c.h.b16 %v750
        %v1037 = vunpack.c.l.b16 %v751
        %v1038 = vunpack.c.h.b16 %v751
        %v1039 = vunpack.c.l.b16 %v752
        %v1040 = vunpack.c.h.b16 %v752
        %v1041 = vpack.c.b16 %v855, %v849
        %v1042 = vpack.c.b16 %v856, %v850
        %v1043 = vpack.c.b16 %v857, %v851
        %v1044 = vpack.c.b16 %v858, %v852
        %v1045 = vpack.c.b16 %v859, %v853
        %v1046 = vpack.c.b16 %v860, %v854
        %v1047 = vpack.c.b16 %v867, %v861
        %v1048 = vpack.c.b16 %v868, %v862
        %v1049 = vpack.c.b16 %v869, %v863
        %v1050 = vpack.c.b16 %v870, %v864
        %v1051 = vpack.c.b16 %v871, %v865
        %v1052 = vpack.c.b16 %v872, %v866
        %v1053 = vpack.c.b16 %v879, %v873
        %v1054 = vpack.c.b16 %v880, %v874
        %v1055 = vpack.c.b16 %v881, %v875
        %v1056 = vpack.c.b16 %v882, %v876
        %v1057 = vpack.c.b16 %v883, %v877
        %v1058 = vpack.c.b16 %v884, %v878
        %v1059 = vpack.c.b16 %v891, %v885
        %v1060 = vpack.c.b16 %v892, %v886
        %v1061 = vpack.c.b16 %v893, %v887
        %v1062 = vpack.c.b16 %v894, %v888
        %v1063 = vpack.c.b16 %v895, %v889
        %v1064 = vpack.c.b16 %v896, %v890
        %v1065 = vpack.c.b16 %v903, %v897
        %v1066 = vpack.c.b16 %v904, %v898
        %v1067 = vpack.c.b16 %v905, %v899
        %v1068 = vpack.c.b16 %v906, %v900
        %v1069 = vpack.c.b16 %v907, %v901
        %v1070 = vpack.c.b16 %v908, %v902
        %v1071 = vpack.c.b16 %v915, %v909
        %v1072 = vpack.c.b16 %v916, %v910
        %v1073 = vpack.c.b16 %v917, %v911
        %v1074 = vpack.c.b16 %v918, %v912
        %v1075 = vpack.c.b16 %v919, %v913
        %v1076 = vpack.c.b16 %v920, %v914
        %v1077 = vpack.c.b16 %v927, %v921
        %v1078 = vpack.c.b16 %v928, %v922
        %v1079 = vpack.c.b16 %v929, %v923
        %v1080 = vpack.c.b16 %v930, %v924
        %v1081 = vpack.c.b16 %v931, %v925
        %v1082 = vpack.c.b16 %v932, %v926
        %v1083 = vpack.c.b16 %v939, %v933
        %v1084 = vpack.c.b16 %v940, %v934
        %v1085 = vpack.c.b16 %v941, %v935
        %v1086 = vpack.c.b16 %v942, %v936
        %v1087 = vpack.c.b16 %v943, %v937
        %v1088 = vpack.c.b16 %v944, %v938
        %v1089 = vpack.c.b16 %v951, %v945
        %v1090 = vpack.c.b16 %v952, %v946
        %v1091 = vpack.c.b16 %v953, %v947
        %v1092 = vpack.c.b16 %v954, %v948
        %v1093 = vpack.c.b16 %v955, %v949
        %v1094 = vpack.c.b16 %v956, %v950
        %v1095 = vpack.c.b16 %v963, %v957
        %v1096 = vpack.c.b16 %v964, %v958
        %v1097 = vpack.c.b16 %v965, %v959
        %v1098 = vpack.c.b16 %v966, %v960
        %v1099 = vpack.c.b16 %v967, %v961
        %v1100 = vpack.c.b16 %v968, %v962
        %v1101 = vpack.c.b16 %v975, %v969
        %v1102 = vpack.c.b16 %v976, %v970
        %v1103 = vpack.c.b16 %v977, %v971
        %v1104 = vpack.c.b16 %v978, %v972
        %v1105 = vpack.c.b16 %v979, %v973
        %v1106 = vpack.c.b16 %v980, %v974
        %v1107 = vpack.c.b16 %v987, %v981
        %v1108 = vpack.c.b16 %v988, %v982
        %v1109 = vpack.c.b16 %v989, %v983
        %v1110 = vpack.c.b16 %v990, %v984
        %v1111 = vpack.c.b16 %v991, %v985
        %v1112 = vpack.c.b16 %v992, %v986
        %v1113 = vpack.c.b16 %v999, %v993
        %v1114 = vpack.c.b16 %v1000, %v994
        %v1115 = vpack.c.b16 %v1001, %v995
        %v1116 = vpack.c.b16 %v1002, %v996
        %v1117 = vpack.c.b16 %v1003, %v997
        %v1118 = vpack.c.b16 %v1004, %v998
        %v1119 = vpack.c.b16 %v1011, %v1005
        %v1120 = vpack.c.b16 %v1012, %v1006
        %v1121 = vpack.c.b16 %v1013, %v1007
        %v1122 = vpack.c.b16 %v1014, %v1008
        %v1123 = vpack.c.b16 %v1015, %v1009
        %v1124 = vpack.c.b16 %v1016, %v1010
        %v1125 = vpack.c.b16 %v1023, %v1017
        %v1126 = vpack.c.b16 %v1024, %v1018
        %v1127 = vpack.c.b16 %v1025, %v1019
        %v1128 = vpack.c.b16 %v1026, %v1020
        %v1129 = vpack.c.b16 %v1027, %v1021
        %v1130 = vpack.c.b16 %v1028, %v1022
        %v1131 = vpack.c.b16 %v1035, %v1029
        %v1132 = vpack.c.b16 %v1036, %v1030
        %v1133 = vpack.c.b16 %v1037, %v1031
        %v1134 = vpack.c.b16 %v1038, %v1032
        %v1135 = vpack.c.b16 %v1039, %v1033
        %v1136 = vpack.c.b16 %v1040, %v1034
        %1233 = vmatprep.subr.bf16.mxu0 %v1084
        %1234 = vmatpush1.bf16.msra.mxu0 %v1083
        %1235 = vmatprep.subr.bf16.mxu0 %v1078
        %1236 = vmatpush1.bf16.msra.mxu0 %v1077
        %1237 = vmatprep.subr.bf16.mxu0 %v1072
        %1238 = vmatpush1.bf16.msra.mxu0 %v1071
        %1239 = vmatprep.subr.bf16.mxu0 %v1066
        %1240 = vmatpush1.bf16.msra.mxu0 %v1065
        %1241 = vmatprep.subr.bf16.mxu0 %v1060
        %1242 = vmatpush1.bf16.msra.mxu0 %v1059
        %1243 = vmatprep.subr.bf16.mxu0 %v1054
        %1244 = vmatpush1.bf16.msra.mxu0 %v1053
        %1245 = vmatprep.subr.bf16.mxu0 %v1048
        %1246 = vmatpush1.bf16.msra.mxu0 %v1047
        %1247 = vmatprep.subr.bf16.mxu0 %v1042
        %1248 = vmatpush1.bf16.msra.mxu0 %v1041
        %1249 = vmatprep.subr.bf16.mxu0 %v1132
        %1250 = vmatpush2.bf16.msra.mxu0 %v1131
        %1251 = vmatprep.subr.bf16.mxu0 %v1126
        %1252 = vmatpush2.bf16.msra.mxu0 %v1125
        %1253 = vmatprep.subr.bf16.mxu0 %v1120
        %1254 = vmatpush2.bf16.msra.mxu0 %v1119
        %1255 = vmatprep.subr.bf16.mxu0 %v1114
        %1256 = vmatpush2.bf16.msra.mxu0 %v1113
        %1257 = vmatprep.subr.bf16.mxu0 %v1108
        %1258 = vmatpush2.bf16.msra.mxu0 %v1107
        %1259 = vmatprep.subr.bf16.mxu0 %v1102
        %1260 = vmatpush2.bf16.msra.mxu0 %v1101
        %1261 = vmatprep.subr.bf16.mxu0 %v1096
        %1262 = vmatpush2.bf16.msra.mxu0 %v1095
        %1263 = vmatprep.subr.bf16.mxu0 %v1090
        %1264 = vmatpush2.bf16.msra.mxu0 %v1089
        %1265 = vmatprep.mubr.bf16.mxu0 %v642
        %1266 = vmatmul.mubr.bf16.gmra.mxu0 %v641
        %v1267 = vpop.f32.mrf.mxu0
        %v1268 = vadd.f32 0.0, %v1267
        %v1269 = vpop.f32.mrf.mxu0
        %v1270 = vadd.f32 0.0, %v1269
        %v1271 = vpop.f32.mrf.mxu0
        %v1272 = vadd.f32 0.0, %v1271
        %v1273 = vpop.f32.mrf.mxu0
        %v1274 = vadd.f32 0.0, %v1273
        %1275 = vmatprep.mubr.bf16.mxu0 %v644
        %1276 = vmatmul.mubr.bf16.gmra.mxu0 %v643
        %v1277 = vpop.f32.mrf.mxu0
        %v1278 = vadd.f32 0.0, %v1277
        %v1279 = vpop.f32.mrf.mxu0
        %v1280 = vadd.f32 0.0, %v1279
        %v1281 = vpop.f32.mrf.mxu0
        %v1282 = vadd.f32 0.0, %v1281
        %v1283 = vpop.f32.mrf.mxu0
        %v1284 = vadd.f32 0.0, %v1283
        %1285 = vmatprep.mubr.bf16.mxu0 %v646
        %1286 = vmatmul.mubr.bf16.gmra.mxu0 %v645
        %v1287 = vpop.f32.mrf.mxu0
        %v1288 = vadd.f32 0.0, %v1287
        %v1289 = vpop.f32.mrf.mxu0
        %v1290 = vadd.f32 0.0, %v1289
        %v1291 = vpop.f32.mrf.mxu0
        %v1292 = vadd.f32 0.0, %v1291
        %v1293 = vpop.f32.mrf.mxu0
        %v1294 = vadd.f32 0.0, %v1293
        %1295 = vmatprep.mubr.bf16.mxu0 %v648
        %1296 = vmatmul.mubr.bf16.gmra.mxu0 %v647
        %v1297 = vpop.f32.mrf.mxu0
        %v1298 = vadd.f32 0.0, %v1297
        %v1299 = vpop.f32.mrf.mxu0
        %v1300 = vadd.f32 0.0, %v1299
        %v1301 = vpop.f32.mrf.mxu0
        %v1302 = vadd.f32 0.0, %v1301
        %v1303 = vpop.f32.mrf.mxu0
        %v1304 = vadd.f32 0.0, %v1303
        %1305 = vmatprep.mubr.bf16.mxu0 %v650
        %1306 = vmatmul.mubr.bf16.gmra.mxu0 %v649
        %v1307 = vpop.f32.mrf.mxu0
        %v1308 = vadd.f32 0.0, %v1307
        %v1309 = vpop.f32.mrf.mxu0
        %v1310 = vadd.f32 0.0, %v1309
        %v1311 = vpop.f32.mrf.mxu0
        %v1312 = vadd.f32 0.0, %v1311
        %v1313 = vpop.f32.mrf.mxu0
        %v1314 = vadd.f32 0.0, %v1313
        %1315 = vmatprep.mubr.bf16.mxu0 %v652
        %1316 = vmatmul.mubr.bf16.gmra.mxu0 %v651
        %v1317 = vpop.f32.mrf.mxu0
        %v1318 = vadd.f32 0.0, %v1317
        %v1319 = vpop.f32.mrf.mxu0
        %v1320 = vadd.f32 0.0, %v1319
        %v1321 = vpop.f32.mrf.mxu0
        %v1322 = vadd.f32 0.0, %v1321
        %v1323 = vpop.f32.mrf.mxu0
        %v1324 = vadd.f32 0.0, %v1323
        %1325 = vmatprep.mubr.bf16.mxu0 %v654
        %1326 = vmatmul.mubr.bf16.gmra.mxu0 %v653
        %v1327 = vpop.f32.mrf.mxu0
        %v1328 = vadd.f32 0.0, %v1327
        %v1329 = vpop.f32.mrf.mxu0
        %v1330 = vadd.f32 0.0, %v1329
        %v1331 = vpop.f32.mrf.mxu0
        %v1332 = vadd.f32 0.0, %v1331
        %v1333 = vpop.f32.mrf.mxu0
        %v1334 = vadd.f32 0.0, %v1333
        %1335 = vmatprep.mubr.bf16.mxu0 %v656
        %1336 = vmatmul.mubr.bf16.gmra.mxu0 %v655
        %v1337 = vpop.f32.mrf.mxu0
        %v1338 = vadd.f32 0.0, %v1337
        %v1339 = vpop.f32.mrf.mxu0
        %v1340 = vadd.f32 0.0, %v1339
        %v1341 = vpop.f32.mrf.mxu0
        %v1342 = vadd.f32 0.0, %v1341
        %v1343 = vpop.f32.mrf.mxu0
        %v1344 = vadd.f32 0.0, %v1343
        %1345 = vdwg.mxu0
        %1346 = vmatprep.subr.bf16.mxu0 %v1086
        %1347 = vmatpush1.bf16.msra.mxu0 %v1085
        %1348 = vmatprep.subr.bf16.mxu0 %v1080
        %1349 = vmatpush1.bf16.msra.mxu0 %v1079
        %1350 = vmatprep.subr.bf16.mxu0 %v1074
        %1351 = vmatpush1.bf16.msra.mxu0 %v1073
        %1352 = vmatprep.subr.bf16.mxu0 %v1068
        %1353 = vmatpush1.bf16.msra.mxu0 %v1067
        %1354 = vmatprep.subr.bf16.mxu0 %v1062
        %1355 = vmatpush1.bf16.msra.mxu0 %v1061
        %1356 = vmatprep.subr.bf16.mxu0 %v1056
        %1357 = vmatpush1.bf16.msra.mxu0 %v1055
        %1358 = vmatprep.subr.bf16.mxu0 %v1050
        %1359 = vmatpush1.bf16.msra.mxu0 %v1049
        %1360 = vmatprep.subr.bf16.mxu0 %v1044
        %1361 = vmatpush1.bf16.msra.mxu0 %v1043
        %1362 = vmatprep.subr.bf16.mxu0 %v1134
        %1363 = vmatpush2.bf16.msra.mxu0 %v1133
        %1364 = vmatprep.subr.bf16.mxu0 %v1128
        %1365 = vmatpush2.bf16.msra.mxu0 %v1127
        %1366 = vmatprep.subr.bf16.mxu0 %v1122
        %1367 = vmatpush2.bf16.msra.mxu0 %v1121
        %1368 = vmatprep.subr.bf16.mxu0 %v1116
        %1369 = vmatpush2.bf16.msra.mxu0 %v1115
        %1370 = vmatprep.subr.bf16.mxu0 %v1110
        %1371 = vmatpush2.bf16.msra.mxu0 %v1109
        %1372 = vmatprep.subr.bf16.mxu0 %v1104
        %1373 = vmatpush2.bf16.msra.mxu0 %v1103
        %1374 = vmatprep.subr.bf16.mxu0 %v1098
        %1375 = vmatpush2.bf16.msra.mxu0 %v1097
        %1376 = vmatprep.subr.bf16.mxu0 %v1092
        %1377 = vmatpush2.bf16.msra.mxu0 %v1091
        %1378 = vmatprep.mubr.bf16.mxu0 %v642
        %1379 = vmatmul.mubr.bf16.gmra.mxu0 %v641
        %v1380 = vpop.f32.mrf.mxu0
        %v1381 = vadd.f32 0.0, %v1380
        %v1382 = vpop.f32.mrf.mxu0
        %v1383 = vadd.f32 0.0, %v1382
        %v1384 = vpop.f32.mrf.mxu0
        %v1385 = vadd.f32 0.0, %v1384
        %v1386 = vpop.f32.mrf.mxu0
        %v1387 = vadd.f32 0.0, %v1386
        %1388 = vmatprep.mubr.bf16.mxu0 %v644
        %1389 = vmatmul.mubr.bf16.gmra.mxu0 %v643
        %v1390 = vpop.f32.mrf.mxu0
        %v1391 = vadd.f32 0.0, %v1390
        %v1392 = vpop.f32.mrf.mxu0
        %v1393 = vadd.f32 0.0, %v1392
        %v1394 = vpop.f32.mrf.mxu0
        %v1395 = vadd.f32 0.0, %v1394
        %v1396 = vpop.f32.mrf.mxu0
        %v1397 = vadd.f32 0.0, %v1396
        %1398 = vmatprep.mubr.bf16.mxu0 %v646
        %1399 = vmatmul.mubr.bf16.gmra.mxu0 %v645
        %v1400 = vpop.f32.mrf.mxu0
        %v1401 = vadd.f32 0.0, %v1400
        %v1402 = vpop.f32.mrf.mxu0
        %v1403 = vadd.f32 0.0, %v1402
        %v1404 = vpop.f32.mrf.mxu0
        %v1405 = vadd.f32 0.0, %v1404
        %v1406 = vpop.f32.mrf.mxu0
        %v1407 = vadd.f32 0.0, %v1406
        %1408 = vmatprep.mubr.bf16.mxu0 %v648
        %1409 = vmatmul.mubr.bf16.gmra.mxu0 %v647
        %v1410 = vpop.f32.mrf.mxu0
        %v1411 = vadd.f32 0.0, %v1410
        %v1412 = vpop.f32.mrf.mxu0
        %v1413 = vadd.f32 0.0, %v1412
        %v1414 = vpop.f32.mrf.mxu0
        %v1415 = vadd.f32 0.0, %v1414
        %v1416 = vpop.f32.mrf.mxu0
        %v1417 = vadd.f32 0.0, %v1416
        %1418 = vmatprep.mubr.bf16.mxu0 %v650
        %1419 = vmatmul.mubr.bf16.gmra.mxu0 %v649
        %v1420 = vpop.f32.mrf.mxu0
        %v1421 = vadd.f32 0.0, %v1420
        %v1422 = vpop.f32.mrf.mxu0
        %v1423 = vadd.f32 0.0, %v1422
        %v1424 = vpop.f32.mrf.mxu0
        %v1425 = vadd.f32 0.0, %v1424
        %v1426 = vpop.f32.mrf.mxu0
        %v1427 = vadd.f32 0.0, %v1426
        %1428 = vmatprep.mubr.bf16.mxu0 %v652
        %1429 = vmatmul.mubr.bf16.gmra.mxu0 %v651
        %v1430 = vpop.f32.mrf.mxu0
        %v1431 = vadd.f32 0.0, %v1430
        %v1432 = vpop.f32.mrf.mxu0
        %v1433 = vadd.f32 0.0, %v1432
        %v1434 = vpop.f32.mrf.mxu0
        %v1435 = vadd.f32 0.0, %v1434
        %v1436 = vpop.f32.mrf.mxu0
        %v1437 = vadd.f32 0.0, %v1436
        %1438 = vmatprep.mubr.bf16.mxu0 %v654
        %1439 = vmatmul.mubr.bf16.gmra.mxu0 %v653
        %v1440 = vpop.f32.mrf.mxu0
        %v1441 = vadd.f32 0.0, %v1440
        %v1442 = vpop.f32.mrf.mxu0
        %v1443 = vadd.f32 0.0, %v1442
        %v1444 = vpop.f32.mrf.mxu0
        %v1445 = vadd.f32 0.0, %v1444
        %v1446 = vpop.f32.mrf.mxu0
        %v1447 = vadd.f32 0.0, %v1446
        %1448 = vmatprep.mubr.bf16.mxu0 %v656
        %1449 = vmatmul.mubr.bf16.gmra.mxu0 %v655
        %v1450 = vpop.f32.mrf.mxu0
        %v1451 = vadd.f32 0.0, %v1450
        %v1452 = vpop.f32.mrf.mxu0
        %v1453 = vadd.f32 0.0, %v1452
        %v1454 = vpop.f32.mrf.mxu0
        %v1455 = vadd.f32 0.0, %v1454
        %v1456 = vpop.f32.mrf.mxu0
        %v1457 = vadd.f32 0.0, %v1456
        %1458 = vdwg.mxu0
        %1459 = vmatprep.subr.bf16.mxu0 %v1088
        %1460 = vmatpush1.bf16.msra.mxu0 %v1087
        %1461 = vmatprep.subr.bf16.mxu0 %v1082
        %1462 = vmatpush1.bf16.msra.mxu0 %v1081
        %1463 = vmatprep.subr.bf16.mxu0 %v1076
        %1464 = vmatpush1.bf16.msra.mxu0 %v1075
        %1465 = vmatprep.subr.bf16.mxu0 %v1070
        %1466 = vmatpush1.bf16.msra.mxu0 %v1069
        %1467 = vmatprep.subr.bf16.mxu0 %v1064
        %1468 = vmatpush1.bf16.msra.mxu0 %v1063
        %1469 = vmatprep.subr.bf16.mxu0 %v1058
        %1470 = vmatpush1.bf16.msra.mxu0 %v1057
        %1471 = vmatprep.subr.bf16.mxu0 %v1052
        %1472 = vmatpush1.bf16.msra.mxu0 %v1051
        %1473 = vmatprep.subr.bf16.mxu0 %v1046
        %1474 = vmatpush1.bf16.msra.mxu0 %v1045
        %1475 = vmatprep.subr.bf16.mxu0 %v1136
        %1476 = vmatpush2.bf16.msra.mxu0 %v1135
        %1477 = vmatprep.subr.bf16.mxu0 %v1130
        %1478 = vmatpush2.bf16.msra.mxu0 %v1129
        %1479 = vmatprep.subr.bf16.mxu0 %v1124
        %1480 = vmatpush2.bf16.msra.mxu0 %v1123
        %1481 = vmatprep.subr.bf16.mxu0 %v1118
        %1482 = vmatpush2.bf16.msra.mxu0 %v1117
        %1483 = vmatprep.subr.bf16.mxu0 %v1112
        %1484 = vmatpush2.bf16.msra.mxu0 %v1111
        %1485 = vmatprep.subr.bf16.mxu0 %v1106
        %1486 = vmatpush2.bf16.msra.mxu0 %v1105
        %1487 = vmatprep.subr.bf16.mxu0 %v1100
        %1488 = vmatpush2.bf16.msra.mxu0 %v1099
        %1489 = vmatprep.subr.bf16.mxu0 %v1094
        %1490 = vmatpush2.bf16.msra.mxu0 %v1093
        %1491 = vmatprep.mubr.bf16.mxu0 %v642
        %1492 = vmatmul.mubr.bf16.gmra.mxu0 %v641
        %v1493 = vpop.f32.mrf.mxu0
        %v1494 = vadd.f32 0.0, %v1493
        %v1495 = vpop.f32.mrf.mxu0
        %v1496 = vadd.f32 0.0, %v1495
        %v1497 = vpop.f32.mrf.mxu0
        %v1498 = vadd.f32 0.0, %v1497
        %v1499 = vpop.f32.mrf.mxu0
        %v1500 = vadd.f32 0.0, %v1499
        %1501 = vmatprep.mubr.bf16.mxu0 %v644
        %1502 = vmatmul.mubr.bf16.gmra.mxu0 %v643
        %v1503 = vpop.f32.mrf.mxu0
        %v1504 = vadd.f32 0.0, %v1503
        %v1505 = vpop.f32.mrf.mxu0
        %v1506 = vadd.f32 0.0, %v1505
        %v1507 = vpop.f32.mrf.mxu0
        %v1508 = vadd.f32 0.0, %v1507
        %v1509 = vpop.f32.mrf.mxu0
        %v1510 = vadd.f32 0.0, %v1509
        %1511 = vmatprep.mubr.bf16.mxu0 %v646
        %1512 = vmatmul.mubr.bf16.gmra.mxu0 %v645
        %v1513 = vpop.f32.mrf.mxu0
        %v1514 = vadd.f32 0.0, %v1513
        %v1515 = vpop.f32.mrf.mxu0
        %v1516 = vadd.f32 0.0, %v1515
        %v1517 = vpop.f32.mrf.mxu0
        %v1518 = vadd.f32 0.0, %v1517
        %v1519 = vpop.f32.mrf.mxu0
        %v1520 = vadd.f32 0.0, %v1519
        %1521 = vmatprep.mubr.bf16.mxu0 %v648
        %1522 = vmatmul.mubr.bf16.gmra.mxu0 %v647
        %v1523 = vpop.f32.mrf.mxu0
        %v1524 = vadd.f32 0.0, %v1523
        %v1525 = vpop.f32.mrf.mxu0
        %v1526 = vadd.f32 0.0, %v1525
        %v1527 = vpop.f32.mrf.mxu0
        %v1528 = vadd.f32 0.0, %v1527
        %v1529 = vpop.f32.mrf.mxu0
        %v1530 = vadd.f32 0.0, %v1529
        %1531 = vmatprep.mubr.bf16.mxu0 %v650
        %1532 = vmatmul.mubr.bf16.gmra.mxu0 %v649
        %v1533 = vpop.f32.mrf.mxu0
        %v1534 = vadd.f32 0.0, %v1533
        %v1535 = vpop.f32.mrf.mxu0
        %v1536 = vadd.f32 0.0, %v1535
        %v1537 = vpop.f32.mrf.mxu0
        %v1538 = vadd.f32 0.0, %v1537
        %v1539 = vpop.f32.mrf.mxu0
        %v1540 = vadd.f32 0.0, %v1539
        %1541 = vmatprep.mubr.bf16.mxu0 %v652
        %1542 = vmatmul.mubr.bf16.gmra.mxu0 %v651
        %v1543 = vpop.f32.mrf.mxu0
        %v1544 = vadd.f32 0.0, %v1543
        %v1545 = vpop.f32.mrf.mxu0
        %v1546 = vadd.f32 0.0, %v1545
        %v1547 = vpop.f32.mrf.mxu0
        %v1548 = vadd.f32 0.0, %v1547
        %v1549 = vpop.f32.mrf.mxu0
        %v1550 = vadd.f32 0.0, %v1549
        %1551 = vmatprep.mubr.bf16.mxu0 %v654
        %1552 = vmatmul.mubr.bf16.gmra.mxu0 %v653
        %v1553 = vpop.f32.mrf.mxu0
        %v1554 = vadd.f32 0.0, %v1553
        %v1555 = vpop.f32.mrf.mxu0
        %v1556 = vadd.f32 0.0, %v1555
        %v1557 = vpop.f32.mrf.mxu0
        %v1558 = vadd.f32 0.0, %v1557
        %v1559 = vpop.f32.mrf.mxu0
        %v1560 = vadd.f32 0.0, %v1559
        %1561 = vmatprep.mubr.bf16.mxu0 %v656
        %1562 = vmatmul.mubr.bf16.gmra.mxu0 %v655
        %v1563 = vpop.f32.mrf.mxu0
        %v1564 = vadd.f32 0.0, %v1563
        %v1565 = vpop.f32.mrf.mxu0
        %v1566 = vadd.f32 0.0, %v1565
        %v1567 = vpop.f32.mrf.mxu0
        %v1568 = vadd.f32 0.0, %v1567
        %v1569 = vpop.f32.mrf.mxu0
        %v1570 = vadd.f32 0.0, %v1569
        %1571 = vdwg.mxu0
        %v1572 = vpack.c.bf16 %v1272, %v1268
        %v1573 = vpack.c.bf16 %v1274, %v1270
        %v1574 = vpack.c.bf16 %v1385, %v1381
        %v1575 = vpack.c.bf16 %v1387, %v1383
        %v1576 = vpack.c.bf16 %v1498, %v1494
        %v1577 = vpack.c.bf16 %v1500, %v1496
        %v1578 = vpack.c.bf16 %v1282, %v1278
        %v1579 = vpack.c.bf16 %v1284, %v1280
        %v1580 = vpack.c.bf16 %v1395, %v1391
        %v1581 = vpack.c.bf16 %v1397, %v1393
        %v1582 = vpack.c.bf16 %v1508, %v1504
        %v1583 = vpack.c.bf16 %v1510, %v1506
        %v1584 = vpack.c.bf16 %v1292, %v1288
        %v1585 = vpack.c.bf16 %v1294, %v1290
        %v1586 = vpack.c.bf16 %v1405, %v1401
        %v1587 = vpack.c.bf16 %v1407, %v1403
        %v1588 = vpack.c.bf16 %v1518, %v1514
        %v1589 = vpack.c.bf16 %v1520, %v1516
        %v1590 = vpack.c.bf16 %v1302, %v1298
        %v1591 = vpack.c.bf16 %v1304, %v1300
        %v1592 = vpack.c.bf16 %v1415, %v1411
        %v1593 = vpack.c.bf16 %v1417, %v1413
        %v1594 = vpack.c.bf16 %v1528, %v1524
        %v1595 = vpack.c.bf16 %v1530, %v1526
        %v1596 = vpack.c.bf16 %v1312, %v1308
        %v1597 = vpack.c.bf16 %v1314, %v1310
        %v1598 = vpack.c.bf16 %v1425, %v1421
        %v1599 = vpack.c.bf16 %v1427, %v1423
        %v1600 = vpack.c.bf16 %v1538, %v1534
        %v1601 = vpack.c.bf16 %v1540, %v1536
        %v1602 = vpack.c.bf16 %v1322, %v1318
        %v1603 = vpack.c.bf16 %v1324, %v1320
        %v1604 = vpack.c.bf16 %v1435, %v1431
        %v1605 = vpack.c.bf16 %v1437, %v1433
        %v1606 = vpack.c.bf16 %v1548, %v1544
        %v1607 = vpack.c.bf16 %v1550, %v1546
        %v1608 = vpack.c.bf16 %v1332, %v1328
        %v1609 = vpack.c.bf16 %v1334, %v1330
        %v1610 = vpack.c.bf16 %v1445, %v1441
        %v1611 = vpack.c.bf16 %v1447, %v1443
        %v1612 = vpack.c.bf16 %v1558, %v1554
        %v1613 = vpack.c.bf16 %v1560, %v1556
        %v1614 = vpack.c.bf16 %v1342, %v1338
        %v1615 = vpack.c.bf16 %v1344, %v1340
        %v1616 = vpack.c.bf16 %v1455, %v1451
        %v1617 = vpack.c.bf16 %v1457, %v1453
        %v1618 = vpack.c.bf16 %v1568, %v1564
        %v1619 = vpack.c.bf16 %v1570, %v1566
        %v1668 = vunpack.c.l.b16 %v1572
        %v1669 = vunpack.c.l.b16 %v1573
        %v1670 = vunpack.c.l.b16 %v1574
        %v1671 = vunpack.c.l.b16 %v1575
        %v1672 = vunpack.c.l.b16 %v1576
        %v1673 = vunpack.c.l.b16 %v1577
        %v1674 = vunpack.c.h.b16 %v1572
        %v1675 = vunpack.c.h.b16 %v1573
        %v1676 = vunpack.c.h.b16 %v1574
        %v1677 = vunpack.c.h.b16 %v1575
        %v1678 = vunpack.c.h.b16 %v1576
        %v1679 = vunpack.c.h.b16 %v1577
        %v1680 = vunpack.c.l.b16 %v1578
        %v1681 = vunpack.c.l.b16 %v1579
        %v1682 = vunpack.c.l.b16 %v1580
        %v1683 = vunpack.c.l.b16 %v1581
        %v1684 = vunpack.c.l.b16 %v1582
        %v1685 = vunpack.c.l.b16 %v1583
        %v1686 = vunpack.c.h.b16 %v1578
        %v1687 = vunpack.c.h.b16 %v1579
        %v1688 = vunpack.c.h.b16 %v1580
        %v1689 = vunpack.c.h.b16 %v1581
        %v1690 = vunpack.c.h.b16 %v1582
        %v1691 = vunpack.c.h.b16 %v1583
        %v1692 = vunpack.c.l.b16 %v1584
        %v1693 = vunpack.c.l.b16 %v1585
        %v1694 = vunpack.c.l.b16 %v1586
        %v1695 = vunpack.c.l.b16 %v1587
        %v1696 = vunpack.c.l.b16 %v1588
        %v1697 = vunpack.c.l.b16 %v1589
        %v1698 = vunpack.c.h.b16 %v1584
        %v1699 = vunpack.c.h.b16 %v1585
        %v1700 = vunpack.c.h.b16 %v1586
        %v1701 = vunpack.c.h.b16 %v1587
        %v1702 = vunpack.c.h.b16 %v1588
        %v1703 = vunpack.c.h.b16 %v1589
        %v1704 = vunpack.c.l.b16 %v1590
        %v1705 = vunpack.c.l.b16 %v1591
        %v1706 = vunpack.c.l.b16 %v1592
        %v1707 = vunpack.c.l.b16 %v1593
        %v1708 = vunpack.c.l.b16 %v1594
        %v1709 = vunpack.c.l.b16 %v1595
        %v1710 = vunpack.c.h.b16 %v1590
        %v1711 = vunpack.c.h.b16 %v1591
        %v1712 = vunpack.c.h.b16 %v1592
        %v1713 = vunpack.c.h.b16 %v1593
        %v1714 = vunpack.c.h.b16 %v1594
        %v1715 = vunpack.c.h.b16 %v1595
        %v1716 = vunpack.c.l.b16 %v1596
        %v1717 = vunpack.c.l.b16 %v1597
        %v1718 = vunpack.c.l.b16 %v1598
        %v1719 = vunpack.c.l.b16 %v1599
        %v1720 = vunpack.c.l.b16 %v1600
        %v1721 = vunpack.c.l.b16 %v1601
        %v1722 = vunpack.c.h.b16 %v1596
        %v1723 = vunpack.c.h.b16 %v1597
        %v1724 = vunpack.c.h.b16 %v1598
        %v1725 = vunpack.c.h.b16 %v1599
        %v1726 = vunpack.c.h.b16 %v1600
        %v1727 = vunpack.c.h.b16 %v1601
        %v1728 = vunpack.c.l.b16 %v1602
        %v1729 = vunpack.c.l.b16 %v1603
        %v1730 = vunpack.c.l.b16 %v1604
        %v1731 = vunpack.c.l.b16 %v1605
        %v1732 = vunpack.c.l.b16 %v1606
        %v1733 = vunpack.c.l.b16 %v1607
        %v1734 = vunpack.c.h.b16 %v1602
        %v1735 = vunpack.c.h.b16 %v1603
        %v1736 = vunpack.c.h.b16 %v1604
        %v1737 = vunpack.c.h.b16 %v1605
        %v1738 = vunpack.c.h.b16 %v1606
        %v1739 = vunpack.c.h.b16 %v1607
        %v1740 = vunpack.c.l.b16 %v1608
        %v1741 = vunpack.c.l.b16 %v1609
        %v1742 = vunpack.c.l.b16 %v1610
        %v1743 = vunpack.c.l.b16 %v1611
        %v1744 = vunpack.c.l.b16 %v1612
        %v1745 = vunpack.c.l.b16 %v1613
        %v1746 = vunpack.c.h.b16 %v1608
        %v1747 = vunpack.c.h.b16 %v1609
        %v1748 = vunpack.c.h.b16 %v1610
        %v1749 = vunpack.c.h.b16 %v1611
        %v1750 = vunpack.c.h.b16 %v1612
        %v1751 = vunpack.c.h.b16 %v1613
        %v1752 = vunpack.c.l.b16 %v1614
        %v1753 = vunpack.c.l.b16 %v1615
        %v1754 = vunpack.c.l.b16 %v1616
        %v1755 = vunpack.c.l.b16 %v1617
        %v1756 = vunpack.c.l.b16 %v1618
        %v1757 = vunpack.c.l.b16 %v1619
        %v1758 = vunpack.c.h.b16 %v1614
        %v1759 = vunpack.c.h.b16 %v1615
        %v1760 = vunpack.c.h.b16 %v1616
        %v1761 = vunpack.c.h.b16 %v1617
        %v1762 = vunpack.c.h.b16 %v1618
        %v1763 = vunpack.c.h.b16 %v1619
        %v1764 = vpack.c.b16 %v1669, %v1668
        %v1765 = vpack.c.b16 %v1671, %v1670
        %v1766 = vpack.c.b16 %v1673, %v1672
        %v1767 = vpack.c.b16 %v1675, %v1674
        %v1768 = vpack.c.b16 %v1677, %v1676
        %v1769 = vpack.c.b16 %v1679, %v1678
        %v1770 = vpack.c.b16 %v1681, %v1680
        %v1771 = vpack.c.b16 %v1683, %v1682
        %v1772 = vpack.c.b16 %v1685, %v1684
        %v1773 = vpack.c.b16 %v1687, %v1686
        %v1774 = vpack.c.b16 %v1689, %v1688
        %v1775 = vpack.c.b16 %v1691, %v1690
        %v1776 = vpack.c.b16 %v1693, %v1692
        %v1777 = vpack.c.b16 %v1695, %v1694
        %v1778 = vpack.c.b16 %v1697, %v1696
        %v1779 = vpack.c.b16 %v1699, %v1698
        %v1780 = vpack.c.b16 %v1701, %v1700
        %v1781 = vpack.c.b16 %v1703, %v1702
        %v1782 = vpack.c.b16 %v1705, %v1704
        %v1783 = vpack.c.b16 %v1707, %v1706
        %v1784 = vpack.c.b16 %v1709, %v1708
        %v1785 = vpack.c.b16 %v1711, %v1710
        %v1786 = vpack.c.b16 %v1713, %v1712
        %v1787 = vpack.c.b16 %v1715, %v1714
        %v1788 = vpack.c.b16 %v1717, %v1716
        %v1789 = vpack.c.b16 %v1719, %v1718
        %v1790 = vpack.c.b16 %v1721, %v1720
        %v1791 = vpack.c.b16 %v1723, %v1722
        %v1792 = vpack.c.b16 %v1725, %v1724
        %v1793 = vpack.c.b16 %v1727, %v1726
        %v1794 = vpack.c.b16 %v1729, %v1728
        %v1795 = vpack.c.b16 %v1731, %v1730
        %v1796 = vpack.c.b16 %v1733, %v1732
        %v1797 = vpack.c.b16 %v1735, %v1734
        %v1798 = vpack.c.b16 %v1737, %v1736
        %v1799 = vpack.c.b16 %v1739, %v1738
        %v1800 = vpack.c.b16 %v1741, %v1740
        %v1801 = vpack.c.b16 %v1743, %v1742
        %v1802 = vpack.c.b16 %v1745, %v1744
        %v1803 = vpack.c.b16 %v1747, %v1746
        %v1804 = vpack.c.b16 %v1749, %v1748
        %v1805 = vpack.c.b16 %v1751, %v1750
        %v1806 = vpack.c.b16 %v1753, %v1752
        %v1807 = vpack.c.b16 %v1755, %v1754
        %v1808 = vpack.c.b16 %v1757, %v1756
        %v1809 = vpack.c.b16 %v1759, %v1758
        %v1810 = vpack.c.b16 %v1761, %v1760
        %v1811 = vpack.c.b16 %v1763, %v1762
        %1860 = vst [vmem:[%s261] sm:$0xff] %v1764
        %1861 = vst [vmem:[%s261 + $0x8] sm:$0xff] %v1765
        %1862 = vst [vmem:[%s261 + $0x10] sm:$0xff] %v1766
        %1863 = vst [vmem:[%s261 + $0x18] sm:$0xff] %v1767
        %1864 = vst [vmem:[%s261 + $0x20] sm:$0xff] %v1768
        %1865 = vst [vmem:[%s261 + $0x28] sm:$0xff] %v1769
        %1866 = vst [vmem:[%s261 + $0x30] sm:$0xff] %v1770
        %1867 = vst [vmem:[%s261 + $0x38] sm:$0xff] %v1771
        %1868 = vst [vmem:[%s261 + $0x40] sm:$0xff] %v1772
        %1869 = vst [vmem:[%s261 + $0x48] sm:$0xff] %v1773
        %1870 = vst [vmem:[%s261 + $0x50] sm:$0xff] %v1774
        %1871 = vst [vmem:[%s261 + $0x58] sm:$0xff] %v1775
        %1872 = vst [vmem:[%s261 + $0x60] sm:$0xff] %v1776
        %1873 = vst [vmem:[%s261 + $0x68] sm:$0xff] %v1777
        %1874 = vst [vmem:[%s261 + $0x70] sm:$0xff] %v1778
        %1875 = vst [vmem:[%s261 + $0x78] sm:$0xff] %v1779
        %1876 = vst [vmem:[%s261 + $0x80] sm:$0xff] %v1780
        %1877 = vst [vmem:[%s261 + $0x88] sm:$0xff] %v1781
        %1878 = vst [vmem:[%s261 + $0x90] sm:$0xff] %v1782
        %1879 = vst [vmem:[%s261 + $0x98] sm:$0xff] %v1783
        %1880 = vst [vmem:[%s261 + $0xa0] sm:$0xff] %v1784
        %1881 = vst [vmem:[%s261 + $0xa8] sm:$0xff] %v1785
        %1882 = vst [vmem:[%s261 + $0xb0] sm:$0xff] %v1786
        %1883 = vst [vmem:[%s261 + $0xb8] sm:$0xff] %v1787
        %1884 = vst [vmem:[%s261 + $0xc0] sm:$0xff] %v1788
        %1885 = vst [vmem:[%s261 + $0xc8] sm:$0xff] %v1789
        %1886 = vst [vmem:[%s261 + $0xd0] sm:$0xff] %v1790
        %1887 = vst [vmem:[%s261 + $0xd8] sm:$0xff] %v1791
        %1888 = vst [vmem:[%s261 + $0xe0] sm:$0xff] %v1792
        %1889 = vst [vmem:[%s261 + $0xe8] sm:$0xff] %v1793
        %1890 = vst [vmem:[%s261 + $0xf0] sm:$0xff] %v1794
        %1891 = vst [vmem:[%s261 + $0xf8] sm:$0xff] %v1795
        %1892 = vst [vmem:[%s261 + $0x100] sm:$0xff] %v1796
        %1893 = vst [vmem:[%s261 + $0x108] sm:$0xff] %v1797
        %1894 = vst [vmem:[%s261 + $0x110] sm:$0xff] %v1798
        %1895 = vst [vmem:[%s261 + $0x118] sm:$0xff] %v1799
        %1896 = vst [vmem:[%s261 + $0x120] sm:$0xff] %v1800
        %1897 = vst [vmem:[%s261 + $0x128] sm:$0xff] %v1801
        %1898 = vst [vmem:[%s261 + $0x130] sm:$0xff] %v1802
        %1899 = vst [vmem:[%s261 + $0x138] sm:$0xff] %v1803
        %1900 = vst [vmem:[%s261 + $0x140] sm:$0xff] %v1804
        %1901 = vst [vmem:[%s261 + $0x148] sm:$0xff] %v1805
        %1902 = vst [vmem:[%s261 + $0x150] sm:$0xff] %v1806
        %1903 = vst [vmem:[%s261 + $0x158] sm:$0xff] %v1807
        %1904 = vst [vmem:[%s261 + $0x160] sm:$0xff] %v1808
        %1905 = vst [vmem:[%s261 + $0x168] sm:$0xff] %v1809
        %1906 = vst [vmem:[%s261 + $0x170] sm:$0xff] %v1810
        %1907 = vst [vmem:[%s261 + $0x178] sm:$0xff] %v1811
        %s1908 = sand.u32 %s135, 1
        %s1909 = scalar_lea.sflag [#allocation4], %s1908
        %s1910 = sand.u32 %s135, 1
        %s1911 = smul.addr %s1910, 384
        %s1912 = scalar_lea.vmem [#allocation8], %s1911
        // Predicated region
        $region49: #{tpu_custom_call.1} parent=35 // pred_check
          %p1913 = pneg %p145
        $region50: #{tpu_custom_call.1} parent=35 // pred_check_branch
          %1915 = sbr.rel (%p1913) target = $region52
        $region51: #{tpu_custom_call.1} parent=35 // pred_region
          %s1916 = smul.u32 16, %s27
          %s1918 = ssub.s32 6144, 6144
          %1919 = vsyncadd %s1909, %s1918
          %s1920 = smul.addr %s1916, 6
          %s1921 = smul.addr %s26, 192
          %s1922 = sadd.s32 %s1920, %s1921
          %s1923 = smul.addr %s1922, 64
          %s1924 = scalar_lea.hbm %s4, %s1923
          %s1925 = sshll.u32 %s1912, 4
          %s1926 = int_to_ptr.vmem [resolvable:$true] %s1925
          %1931 = dma.vmem_to_hbm [thread:$0]  %s1926, 6144, %s1924, %s1909, 384, 384, 24
        $region52: #{tpu_custom_call.1} parent=35 // pred_fallthru
          _
      $region36: #{tpu_custom_call.1} parent=5 // pred_fallthru
        _
      %p1932 = scmp.le.s32.totalorder 2, %s17
      // Predicated region
      $region53: #{tpu_custom_call.1} parent=5 // pred_check
        %p1933 = pneg %p1932
      $region54: #{tpu_custom_call.1} parent=5 // pred_check_branch
        %1935 = sbr.rel (%p1933) target = $region56
      $region55: #{tpu_custom_call.1} parent=5 // pred_region
        %s1936 = ssub.s32 %s17, 2
        // Predicated region
        $region57: #{tpu_custom_call.1} parent=55 // pred_check
          %p1937 = pneg %p151
        $region58: #{tpu_custom_call.1} parent=55 // pred_check_branch
          %1939 = sbr.rel (%p1937) target = $region60
        $region59: #{tpu_custom_call.1} parent=55 // pred_region
          %s1940 = sand.u32 %s136, 1
          %s1941 = scalar_lea.sflag [#allocation4], %s1940
          %s1942 = sand.u32 %s136, 1
          %s1943 = smul.addr %s1942, 384
          %s1944 = scalar_lea.vmem [#allocation8], %s1943
          %1945 = dma.done %s1941, 6144
        $region60: #{tpu_custom_call.1} parent=55 // pred_fallthru
          _
      $region56: #{tpu_custom_call.1} parent=5 // pred_fallthru
        _
    $region6: #{tpu_custom_call.1} parent=1 // loop_footer
      %s21 = sadd.s32 1, %s17
    $region7: #{tpu_custom_call.1} parent=1 // loop_footer_branch
      %16 = sbr.rel target = $region3
    $region8: #{tpu_custom_call.1} parent=1 // loop_exit
      _
    %1946 = vsyncpa [#allocation3], 1
    %s1947 = scalar_lea.sflag [#allocation3], 1
    %1948 = vsyncpa %s1947, 1
    %1949 = vsyncpa [#allocation6], 1
    %1950 = vsyncpa [#allocation4], 1
    %s1951 = scalar_lea.sflag [#allocation4], 1
    %1952 = vsyncpa %s1951, 1

</llo_original>
